<compile_context>
chip_gen: v7x
topology: tpu7x:2x2x1
jax: 0.10.0
libtpu: 0.0.40
codegen_flags: <defaults>
</compile_context>

<pallas_src>
import math

import jax
import jax.numpy as jnp
from jax import lax
from jax.experimental import pallas as pl
from jax.experimental.pallas import tpu as pltpu

# ---------------- config (small, consistent with the module) ----------------
B = 2          # batch
T = 8          # sequence length
N_HEAD = 6     # num_heads
HEAD_DIM = 16  # head_dim
C = N_HEAD * HEAD_DIM            # n_embd = 96
N_KV_HEAD = N_HEAD // 3          # = 2  (num_key_value_heads)
GROUPS = N_HEAD // N_KV_HEAD     # = 3  (num_key_value_groups)

Q_N = N_HEAD * HEAD_DIM          # 96
KV_N = N_KV_HEAD * HEAD_DIM      # 32
QK_N = Q_N + KV_N                # 128 : q|k lanes (exactly one lane tile)
QKV_COLS = Q_N + 2 * KV_N        # 160 : [q | k | v] fused projection columns
HALF = HEAD_DIM // 2             # 8


# ------------------------ Pallas kernel: fused attention ---------------------
def _fused_attn_kernel(x_ref, wqkv_ref, cos_ref, sinlo_ref, sinhi_ref, wo_ref,
                       o_ref, qs_ref, at_ref):
    # x_ref      : (R, C)         R = (batches in this grid step) * T
    # wqkv_ref   : (C, 160)       bf16 fused [Wq*scale | Wk | Wv]
    # cos_ref    : (R, 128)       RoPE cos, tiled over q|k lanes
    # sinlo_ref  : (R, 128)       -sin on first half of each head, 0 elsewhere
    # sinhi_ref  : (R, 128)       +sin on second half of each head, 0 elsewhere
    # wo_ref     : (C, C)         bf16 output projection (already transposed)
    # o_ref      : (R, C)
    # qs_ref     : (3*T, D) f32   scratch: group's query heads stacked as rows
    # at_ref     : (T, 3*D) f32   scratch: group's attention output, head lanes
    R = x_ref.shape[0]
    nb = R // T                                                  # batches here

    # One lane-dense fused projection for q, k, v of every head (bf16 in, f32
    # accumulate).  160 output columns == one 256-wide MXU N-tile on v6e/v7x.
    xb = x_ref[...].astype(jnp.bfloat16)
    proj = jnp.dot(xb, wqkv_ref[...], preferred_element_type=jnp.float32)

    qk = proj[:, :QK_N]                                          # (R, 128)
    v_all = proj[:, QK_N:]                                       # (R, 32)

    # RoPE on q and k together (their 128 lanes are one tile; the per-head
    # 16-lane period is unbroken).  rotate_half = two 8-lane shifts; the sign
    # and the half-selection are folded into the precomputed sin tables, so
    # wrapped lanes are multiplied by zero.
    left8 = jnp.concatenate([qk[:, HALF:], qk[:, :HALF]], axis=-1)        # q[j+8]
    right8 = jnp.concatenate([qk[:, QK_N - HALF:], qk[:, :QK_N - HALF]],
                             axis=-1)                                     # q[j-8]
    qk_emb = (qk * cos_ref[...] + left8 * sinlo_ref[...]
              + right8 * sinhi_ref[...])                         # (R, 128)

    # Causal mask for head-stacked score rows: row r = h*T + t  ->  t = r % T.
    qt = lax.broadcasted_iota(jnp.int32, (GROUPS * T, T), 0) % T
    kt = lax.broadcasted_iota(jnp.int32, (GROUPS * T, T), 1)
    causal = kt <= qt                                            # (3T, T)

    for bi in range(nb):                                         # static unroll
        r0 = bi * T
        q_b = qk_emb[r0:r0 + T, :Q_N]                            # (T, 96)
        k_b = qk_emb[r0:r0 + T, Q_N:QK_N]                        # (T, 32)
        v_b = v_all[r0:r0 + T, :]                                # (T, 32)

        acc = jnp.zeros((T, C), jnp.float32)
        for g in range(N_KV_HEAD):                               # 2 KV groups
            # Stage the group's 3 query heads as (3T, D) rows (scratch copy
            # instead of an in-register lane->sublane reshape).
            for h in range(GROUPS):
                col = (g * GROUPS + h) * HEAD_DIM
                qs_ref[h * T:(h + 1) * T, :] = q_b[:, col:col + HEAD_DIM]
            qs = qs_ref[...]                                     # (3T, D)
            kg = k_b[:, g * HEAD_DIM:(g + 1) * HEAD_DIM]         # (T, D)
            vg = v_b[:, g * HEAD_DIM:(g + 1) * HEAD_DIM]         # (T, D)

            # One QK^T per group (scale already folded into Wq).
            s = lax.dot_general(qs, kg, (((1,), (1,)), ((), ())),
                                preferred_element_type=jnp.float32)  # (3T, T)
            s = jnp.where(causal, s, -jnp.inf)
            m = jnp.max(s, axis=-1, keepdims=True)
            p = jnp.exp(s - m)
            l = jnp.sum(p, axis=-1, keepdims=True)
            p = p * pl.reciprocal(l, approx=True)                # EUP divide

            a = jnp.dot(p, vg, preferred_element_type=jnp.float32)   # (3T, D)

            # Lay the group's heads back out lane-contiguously and accumulate
            # the o_proj partial (no global concatenate).
            for h in range(GROUPS):
                at_ref[:, h * HEAD_DIM:(h + 1) * HEAD_DIM] = a[h * T:(h + 1) * T, :]
            attn_g = at_ref[...].astype(jnp.bfloat16)            # (T, 3D)
            wrow = g * GROUPS * HEAD_DIM
            acc = acc + jnp.dot(
                attn_g, wo_ref[wrow:wrow + GROUPS * HEAD_DIM, :],
                preferred_element_type=jnp.float32)              # (T, C)

        o_ref[r0:r0 + T, :] = acc.astype(o_ref.dtype)


# ------------------------------- wrapper -------------------------------------
def rotary_tables(seq_len, dim):
    inv_freq = 1.0 / (10000.0 ** (jnp.arange(0, dim, 2, dtype=jnp.float32) / dim))
    t = jnp.arange(seq_len, dtype=jnp.float32)
    freqs = jnp.einsum('i,j->ij', t, inv_freq)        # (T, D/2)
    emb = jnp.concatenate([freqs, freqs], axis=-1)    # (T, D)
    return jnp.cos(emb), jnp.sin(emb)


def pack_params(wq, wk, wv, wo):
    """One-time weight / table packing (kept out of the per-call jit).

    wq: (H*D, C), wk/wv: (Hkv*D, C), wo: (C, C) in PyTorch Linear layout
    (out_features, in_features).
    """
    scale = 1.0 / math.sqrt(HEAD_DIM)
    w_qkv = jnp.concatenate([wq.T * scale, wk.T, wv.T], axis=1)  # (C, 160)
    w_qkv = w_qkv.astype(jnp.bfloat16)
    wo_t = wo.T.astype(jnp.bfloat16)                             # (C, C)

    cos16, sin16 = rotary_tables(T, HEAD_DIM)                    # (T, 16)
    reps = QK_N // HEAD_DIM                                      # 8 head slots
    cos128 = jnp.tile(cos16, (1, reps))                          # (T, 128)
    sin128 = jnp.tile(sin16, (1, reps))
    lane_d = jnp.arange(QK_N) % HEAD_DIM
    first_half = (lane_d < HALF)[None, :]
    sin_lo = jnp.where(first_half, -sin128, 0.0)                 # first half
    sin_hi = jnp.where(first_half, 0.0, sin128)                  # second half

    def tile_b(a):
        return jnp.tile(a, (B, 1)).astype(jnp.float32)           # (B*T, 128)

    return w_qkv, wo_t, tile_b(cos128), tile_b(sin_lo), tile_b(sin_hi)


def _multi_tensorcore_device():
    """True on TPU generations with >1 TensorCore per device (v4/v5p/v7x)."""
    try:
        kind = jax.devices()[0].device_kind.lower()
    except Exception:
        return False
    return any(tag in kind for tag in ("v4", "v5p", "v7", "7x"))


def build_attention(batch_parallel: bool):
    bblk = 1 if batch_parallel else B      # batches per grid step
    steps = B // bblk
    R = bblk * T

    grid_spec = pltpu.PrefetchScalarGridSpec(
        num_scalar_prefetch=0,
        grid=(steps,),
        in_specs=[
            pl.BlockSpec((R, C), lambda i: (i, 0)),              # x (flattened)
            pl.BlockSpec((C, QKV_COLS), lambda i: (0, 0)),       # fused W_qkv
            pl.BlockSpec((R, QK_N), lambda i: (i, 0)),           # cos
            pl.BlockSpec((R, QK_N), lambda i: (i, 0)),           # sin_lo
            pl.BlockSpec((R, QK_N), lambda i: (i, 0)),           # sin_hi
            pl.BlockSpec((C, C), lambda i: (0, 0)),              # Wo^T
        ],
        out_specs=pl.BlockSpec((R, C), lambda i: (i, 0)),
        scratch_shapes=[
            pltpu.VMEM((GROUPS * T, HEAD_DIM), jnp.float32),     # stacked Q
            pltpu.VMEM((T, GROUPS * HEAD_DIM), jnp.float32),     # group attn
        ],
    )
    call = pl.pallas_call(
        _fused_attn_kernel,
        out_shape=jax.ShapeDtypeStruct((B * T, C), jnp.float32),
        grid_spec=grid_spec,
        compiler_params=pltpu.CompilerParams(
            dimension_semantics=("parallel",)),
    )

    @jax.jit
    def fn(x, w_qkv, wo_t, cos_t, sin_lo_t, sin_hi_t):
        # reshape (B,T,C)<->(B*T,C) is metadata-only; the jit is one thunk.
        out2d = call(x.reshape(B * T, C), w_qkv, cos_t, sin_lo_t, sin_hi_t,
                     wo_t)
        return out2d.reshape(B, T, C)

    return fn


# ------------------------------ reference ------------------------------------
def _rotate_half(u):
    d = u.shape[-1] // 2
    return jnp.concatenate([-u[..., d:], u[..., :d]], axis=-1)


def reference_forward(x, wq, wk, wv, wo):
    HP = lax.Precision.HIGHEST
    D = HEAD_DIM
    q = jnp.einsum('btc,oc->bto', x, wq, precision=HP).reshape(B, T, N_HEAD, D)
    k = jnp.einsum('btc,oc->bto', x, wk, precision=HP).reshape(B, T, N_KV_HEAD, D)
    v = jnp.einsum('btc,oc->bto', x, wv, precision=HP).reshape(B, T, N_KV_HEAD, D)
    k = jnp.repeat(k, GROUPS, axis=2)
    v = jnp.repeat(v, GROUPS, axis=2)
    q, k, v = (a.transpose(0, 2, 1, 3) for a in (q, k, v))       # (B, H, T, D)
    cos, sin = rotary_tables(T, D)
    q = q * cos + _rotate_half(q) * sin
    k = k * cos + _rotate_half(k) * sin
    s = jnp.einsum('bhqd,bhkd->bhqk', q, k, precision=HP) / math.sqrt(D)
    mask = jnp.tril(jnp.ones((T, T), dtype=bool))
    s = jnp.where(mask, s, -jnp.inf)
    p = jax.nn.softmax(s, axis=-1)
    o = jnp.einsum('bhqk,bhkd->bhqd', p, v, precision=HP)
    o = o.transpose(0, 2, 1, 3).reshape(B, T, C)
    return jnp.einsum('btc,oc->bto', o, wo, precision=HP)


# -------------------------------- main ----------------------------------------
if __name__ == "__main__":
    key = jax.random.PRNGKey(0)
    kx, kq, kk, kv, ko = jax.random.split(key, 5)

    x = jax.random.normal(kx, (B, T, C), dtype=jnp.float32)
    # deterministic synthetic weights (PyTorch Linear layout: (out, in))
    wq = 0.02 * jax.random.normal(kq, (N_HEAD * HEAD_DIM, C), dtype=jnp.float32)
    wk = 0.02 * jax.random.normal(kk, (N_KV_HEAD * HEAD_DIM, C), dtype=jnp.float32)
    wv = 0.02 * jax.random.normal(kv, (N_KV_HEAD * HEAD_DIM, C), dtype=jnp.float32)
    wo = 0.02 * jax.random.normal(ko, (C, C), dtype=jnp.float32)

    packed = pack_params(wq, wk, wv, wo)          # one-time packing (bf16)
    attention = build_attention(_multi_tensorcore_device())

    out = attention(x, *packed)
    out = jax.block_until_ready(out)

    ref = reference_forward(x, wq, wk, wv, wo)
    assert out.shape == (B, T, C)
    # kernel uses bf16 weights / default MXU precision + approx reciprocal;
    # reference is full-f32 (HIGHEST)
    assert jnp.allclose(out, ref, atol=2e-3, rtol=2e-3), (
        f"max abs err {jnp.max(jnp.abs(out - ref))}")

    print("KERNEL_OK")
</pallas_src>

<mosaic_0001>
module attributes {stable_mosaic.version = 11 : i64} {
  func.func @_fused_attn_kernel(%arg0: i32, %arg1: memref<16x96xf32, #tpu.memory_space<vmem>>, %arg2: memref<96x160xbf16, #tpu.memory_space<vmem>>, %arg3: memref<16x128xf32, #tpu.memory_space<vmem>>, %arg4: memref<16x128xf32, #tpu.memory_space<vmem>>, %arg5: memref<16x128xf32, #tpu.memory_space<vmem>>, %arg6: memref<96x96xbf16, #tpu.memory_space<vmem>>, %arg7: memref<16x96xf32, #tpu.memory_space<vmem>>, %arg8: memref<24x16xf32, #tpu.memory_space<vmem>>, %arg9: memref<8x48xf32, #tpu.memory_space<vmem>>) attributes {dimension_semantics = [#tpu.dimension_semantics<parallel>], iteration_bounds = array<i64: 1>, scalar_prefetch = 0 : i64, scratch_operands = 2 : i64, tpu.core_type = #tpu.core_type<tc>, window_params = [{transform_indices = @transform_0, window_bounds = array<i64: 16, 96>}, {pipeline_mode = #tpu.pipeline_mode<synchronous>, transform_indices = @transform_1, window_bounds = array<i64: 96, 160>}, {transform_indices = @transform_2, window_bounds = array<i64: 16, 128>}, {transform_indices = @transform_3, window_bounds = array<i64: 16, 128>}, {transform_indices = @transform_4, window_bounds = array<i64: 16, 128>}, {pipeline_mode = #tpu.pipeline_mode<synchronous>, transform_indices = @transform_5, window_bounds = array<i64: 96, 96>}, {transform_indices = @transform_6, window_bounds = array<i64: 16, 96>}]} {
    %c0 = arith.constant 0 : index
    %c0_0 = arith.constant 0 : index
    %0 = vector.load %arg1[%c0, %c0_0] : memref<16x96xf32, #tpu.memory_space<vmem>>, vector<16x96xf32>
    %1 = arith.truncf %0 : vector<16x96xf32> to vector<16x96xbf16>
    %c0_1 = arith.constant 0 : index
    %c0_2 = arith.constant 0 : index
    %2 = vector.load %arg2[%c0_1, %c0_2] : memref<96x160xbf16, #tpu.memory_space<vmem>>, vector<96x160xbf16>
    %cst = arith.constant dense<0.000000e+00> : vector<16x160xf32>
    %3 = tpu.matmul %1, %2, %cst {dimension_numbers = #tpu.dot_dimension_numbers<[1], [0], [0], [1], [0, 0, 1, 1], [], []>} : vector<16x96xbf16>, vector<96x160xbf16>, vector<16x160xf32> -> vector<16x160xf32>
    %4 = vector.extract_strided_slice %3 {offsets = [0, 0], sizes = [16, 128], strides = [1, 1]} : vector<16x160xf32> to vector<16x128xf32>
    %5 = vector.extract_strided_slice %3 {offsets = [0, 128], sizes = [16, 32], strides = [1, 1]} : vector<16x160xf32> to vector<16x32xf32>
    %6 = vector.extract_strided_slice %4 {offsets = [0, 8], sizes = [16, 120], strides = [1, 1]} : vector<16x128xf32> to vector<16x120xf32>
    %7 = vector.extract_strided_slice %4 {offsets = [0, 0], sizes = [16, 8], strides = [1, 1]} : vector<16x128xf32> to vector<16x8xf32>
    %8 = tpu.concatenate %6, %7 in 1 : vector<16x120xf32>, vector<16x8xf32> -> vector<16x128xf32>
    %9 = vector.extract_strided_slice %4 {offsets = [0, 120], sizes = [16, 8], strides = [1, 1]} : vector<16x128xf32> to vector<16x8xf32>
    %10 = vector.extract_strided_slice %4 {offsets = [0, 0], sizes = [16, 120], strides = [1, 1]} : vector<16x128xf32> to vector<16x120xf32>
    %11 = tpu.concatenate %9, %10 in 1 : vector<16x8xf32>, vector<16x120xf32> -> vector<16x128xf32>
    %c0_3 = arith.constant 0 : index
    %c0_4 = arith.constant 0 : index
    %12 = vector.load %arg3[%c0_3, %c0_4] : memref<16x128xf32, #tpu.memory_space<vmem>>, vector<16x128xf32>
    %13 = arith.mulf %4, %12 : vector<16x128xf32>
    %c0_5 = arith.constant 0 : index
    %c0_6 = arith.constant 0 : index
    %14 = vector.load %arg4[%c0_5, %c0_6] : memref<16x128xf32, #tpu.memory_space<vmem>>, vector<16x128xf32>
    %15 = arith.mulf %8, %14 : vector<16x128xf32>
    %16 = arith.addf %13, %15 : vector<16x128xf32>
    %c0_7 = arith.constant 0 : index
    %c0_8 = arith.constant 0 : index
    %17 = vector.load %arg5[%c0_7, %c0_8] : memref<16x128xf32, #tpu.memory_space<vmem>>, vector<16x128xf32>
    %18 = arith.mulf %11, %17 : vector<16x128xf32>
    %19 = arith.addf %16, %18 : vector<16x128xf32>
    %20 = tpu.iota {dimensions = array<i32: 0>} : vector<24x8xi32>
    %c8_i32 = arith.constant 8 : i32
    %c0_i32 = arith.constant 0 : i32
    %21 = arith.cmpi eq, %c8_i32, %c0_i32 : i32
    %c1_i32 = arith.constant 1 : i32
    %22 = arith.select %21, %c1_i32, %c8_i32 : i32
    %23 = vector.broadcast %22 : i32 to vector<24x8xi32>
    %24 = arith.remsi %20, %23 : vector<24x8xi32>
    %c0_i32_9 = arith.constant 0 : i32
    %25 = vector.broadcast %c0_i32_9 : i32 to vector<24x8xi32>
    %26 = arith.cmpi ne, %24, %25 : vector<24x8xi32>
    %c0_i32_10 = arith.constant 0 : i32
    %27 = vector.broadcast %c0_i32_10 : i32 to vector<24x8xi32>
    %28 = arith.cmpi slt, %24, %27 : vector<24x8xi32>
    %c0_i32_11 = arith.constant 0 : i32
    %29 = arith.cmpi slt, %22, %c0_i32_11 : i32
    %30 = vector.broadcast %29 : i1 to vector<24x8xi1>
    %31 = vector.broadcast %30 : vector<24x8xi1> to vector<24x8xi1>
    %32 = arith.xori %28, %31 : vector<24x8xi1>
    %33 = arith.andi %32, %26 : vector<24x8xi1>
    %34 = vector.broadcast %22 : i32 to vector<24x8xi32>
    %35 = arith.addi %24, %34 : vector<24x8xi32>
    %36 = arith.select %33, %35, %24 : vector<24x8xi1>, vector<24x8xi32>
    %37 = tpu.iota {dimensions = array<i32: 1>} : vector<24x8xi32>
    %38 = arith.cmpi sle, %37, %36 : vector<24x8xi32>
    %39 = vector.extract_strided_slice %19 {offsets = [0, 0], sizes = [8, 96], strides = [1, 1]} : vector<16x128xf32> to vector<8x96xf32>
    %40 = vector.extract_strided_slice %19 {offsets = [0, 96], sizes = [8, 32], strides = [1, 1]} : vector<16x128xf32> to vector<8x32xf32>
    %41 = vector.extract_strided_slice %5 {offsets = [0, 0], sizes = [8, 32], strides = [1, 1]} : vector<16x32xf32> to vector<8x32xf32>
    %cst_12 = arith.constant 0.000000e+00 : f32
    %42 = vector.broadcast %cst_12 : f32 to vector<8x96xf32>
    %43 = vector.extract_strided_slice %39 {offsets = [0, 0], sizes = [8, 16], strides = [1, 1]} : vector<8x96xf32> to vector<8x16xf32>
    %c0_13 = arith.constant 0 : index
    %c0_14 = arith.constant 0 : index
    %44 = vector.load %arg8[%c0_13, %c0_14] : memref<24x16xf32, #tpu.memory_space<vmem>>, vector<8x16xf32>
    tpu.vector_store %arg8[%c0_13, %c0_14], %43 {strides = array<i32>} : memref<24x16xf32, #tpu.memory_space<vmem>>, vector<8x16xf32>,
    %45 = vector.extract_strided_slice %39 {offsets = [0, 16], sizes = [8, 16], strides = [1, 1]} : vector<8x96xf32> to vector<8x16xf32>
    %c8 = arith.constant 8 : index
    %c0_15 = arith.constant 0 : index
    %46 = vector.load %arg8[%c8, %c0_15] : memref<24x16xf32, #tpu.memory_space<vmem>>, vector<8x16xf32>
    tpu.vector_store %arg8[%c8, %c0_15], %45 {strides = array<i32>} : memref<24x16xf32, #tpu.memory_space<vmem>>, vector<8x16xf32>,
    %47 = vector.extract_strided_slice %39 {offsets = [0, 32], sizes = [8, 16], strides = [1, 1]} : vector<8x96xf32> to vector<8x16xf32>
    %c16 = arith.constant 16 : index
    %c0_16 = arith.constant 0 : index
    %48 = vector.load %arg8[%c16, %c0_16] : memref<24x16xf32, #tpu.memory_space<vmem>>, vector<8x16xf32>
    tpu.vector_store %arg8[%c16, %c0_16], %47 {strides = array<i32>} : memref<24x16xf32, #tpu.memory_space<vmem>>, vector<8x16xf32>,
    %c0_17 = arith.constant 0 : index
    %c0_18 = arith.constant 0 : index
    %49 = vector.load %arg8[%c0_17, %c0_18] : memref<24x16xf32, #tpu.memory_space<vmem>>, vector<24x16xf32>
    %50 = vector.extract_strided_slice %40 {offsets = [0, 0], sizes = [8, 16], strides = [1, 1]} : vector<8x32xf32> to vector<8x16xf32>
    %51 = vector.extract_strided_slice %41 {offsets = [0, 0], sizes = [8, 16], strides = [1, 1]} : vector<8x32xf32> to vector<8x16xf32>
    %cst_19 = arith.constant dense<0.000000e+00> : vector<24x8xf32>
    %52 = tpu.matmul %49, %50, %cst_19 {dimension_numbers = #tpu.dot_dimension_numbers<[1], [1], [0], [0], [0, 0, 1, 0], [], []>} : vector<24x16xf32>, vector<8x16xf32>, vector<24x8xf32> -> vector<24x8xf32>
    %cst_20 = arith.constant 0xFF800000 : f32
    %53 = vector.broadcast %cst_20 : f32 to vector<24x8xf32>
    %54 = arith.select %38, %52, %53 : vector<24x8xi1>, vector<24x8xf32>
    %cst_21 = arith.constant dense<0xFF800000> : vector<24xf32>
    %55 = vector.multi_reduction <maximumf>, %54, %cst_21 [1] : vector<24x8xf32> to vector<24xf32>
    %56 = vector.shape_cast %55 : vector<24xf32> to vector<24x1xf32>
    %57 = vector.broadcast %56 : vector<24x1xf32> to vector<24x8xf32>
    %58 = arith.subf %54, %57 : vector<24x8xf32>
    %59 = math.exp %58 : vector<24x8xf32>
    %cst_22 = arith.constant dense<0.000000e+00> : vector<24xf32>
    %60 = vector.multi_reduction <add>, %59, %cst_22 [1] : vector<24x8xf32> to vector<24xf32>
    %61 = vector.shape_cast %60 : vector<24xf32> to vector<24x1xf32>
    %62 = tpu.reciprocal %61 {approx = true} : vector<24x1xf32> -> vector<24x1xf32>
    %63 = vector.broadcast %62 : vector<24x1xf32> to vector<24x8xf32>
    %64 = arith.mulf %59, %63 : vector<24x8xf32>
    %cst_23 = arith.constant dense<0.000000e+00> : vector<24x16xf32>
    %65 = tpu.matmul %64, %51, %cst_23 {dimension_numbers = #tpu.dot_dimension_numbers<[1], [0], [0], [1], [0, 0, 1, 1], [], []>} : vector<24x8xf32>, vector<8x16xf32>, vector<24x16xf32> -> vector<24x16xf32>
    %66 = vector.extract_strided_slice %65 {offsets = [0, 0], sizes = [8, 16], strides = [1, 1]} : vector<24x16xf32> to vector<8x16xf32>
    %c0_24 = arith.constant 0 : index
    %c0_25 = arith.constant 0 : index
    %67 = vector.load %arg9[%c0_24, %c0_25] : memref<8x48xf32, #tpu.memory_space<vmem>>, vector<8x16xf32>
    tpu.vector_store %arg9[%c0_24, %c0_25], %66 {strides = array<i32>} : memref<8x48xf32, #tpu.memory_space<vmem>>, vector<8x16xf32>,
    %68 = vector.extract_strided_slice %65 {offsets = [8, 0], sizes = [8, 16], strides = [1, 1]} : vector<24x16xf32> to vector<8x16xf32>
    %c0_26 = arith.constant 0 : index
    %c16_27 = arith.constant 16 : index
    %69 = vector.load %arg9[%c0_26, %c16_27] : memref<8x48xf32, #tpu.memory_space<vmem>>, vector<8x16xf32>
    tpu.vector_store %arg9[%c0_26, %c16_27], %68 {strides = array<i32>} : memref<8x48xf32, #tpu.memory_space<vmem>>, vector<8x16xf32>,
    %70 = vector.extract_strided_slice %65 {offsets = [16, 0], sizes = [8, 16], strides = [1, 1]} : vector<24x16xf32> to vector<8x16xf32>
    %c0_28 = arith.constant 0 : index
    %c32 = arith.constant 32 : index
    %71 = vector.load %arg9[%c0_28, %c32] : memref<8x48xf32, #tpu.memory_space<vmem>>, vector<8x16xf32>
    tpu.vector_store %arg9[%c0_28, %c32], %70 {strides = array<i32>} : memref<8x48xf32, #tpu.memory_space<vmem>>, vector<8x16xf32>,
    %c0_29 = arith.constant 0 : index
    %c0_30 = arith.constant 0 : index
    %72 = vector.load %arg9[%c0_29, %c0_30] : memref<8x48xf32, #tpu.memory_space<vmem>>, vector<8x48xf32>
    %73 = arith.truncf %72 : vector<8x48xf32> to vector<8x48xbf16>
    %c0_31 = arith.constant 0 : index
    %c0_32 = arith.constant 0 : index
    %74 = vector.load %arg6[%c0_31, %c0_32] : memref<96x96xbf16, #tpu.memory_space<vmem>>, vector<48x96xbf16>
    %cst_33 = arith.constant dense<0.000000e+00> : vector<8x96xf32>
    %75 = tpu.matmul %73, %74, %cst_33 {dimension_numbers = #tpu.dot_dimension_numbers<[1], [0], [0], [1], [0, 0, 1, 1], [], []>} : vector<8x48xbf16>, vector<48x96xbf16>, vector<8x96xf32> -> vector<8x96xf32>
    %76 = arith.addf %42, %75 : vector<8x96xf32>
    %77 = vector.extract_strided_slice %39 {offsets = [0, 48], sizes = [8, 16], strides = [1, 1]} : vector<8x96xf32> to vector<8x16xf32>
    %c0_34 = arith.constant 0 : index
    %c0_35 = arith.constant 0 : index
    %78 = vector.load %arg8[%c0_34, %c0_35] : memref<24x16xf32, #tpu.memory_space<vmem>>, vector<8x16xf32>
    tpu.vector_store %arg8[%c0_34, %c0_35], %77 {strides = array<i32>} : memref<24x16xf32, #tpu.memory_space<vmem>>, vector<8x16xf32>,
    %79 = vector.extract_strided_slice %39 {offsets = [0, 64], sizes = [8, 16], strides = [1, 1]} : vector<8x96xf32> to vector<8x16xf32>
    %c8_36 = arith.constant 8 : index
    %c0_37 = arith.constant 0 : index
    %80 = vector.load %arg8[%c8_36, %c0_37] : memref<24x16xf32, #tpu.memory_space<vmem>>, vector<8x16xf32>
    tpu.vector_store %arg8[%c8_36, %c0_37], %79 {strides = array<i32>} : memref<24x16xf32, #tpu.memory_space<vmem>>, vector<8x16xf32>,
    %81 = vector.extract_strided_slice %39 {offsets = [0, 80], sizes = [8, 16], strides = [1, 1]} : vector<8x96xf32> to vector<8x16xf32>
    %c16_38 = arith.constant 16 : index
    %c0_39 = arith.constant 0 : index
    %82 = vector.load %arg8[%c16_38, %c0_39] : memref<24x16xf32, #tpu.memory_space<vmem>>, vector<8x16xf32>
    tpu.vector_store %arg8[%c16_38, %c0_39], %81 {strides = array<i32>} : memref<24x16xf32, #tpu.memory_space<vmem>>, vector<8x16xf32>,
    %c0_40 = arith.constant 0 : index
    %c0_41 = arith.constant 0 : index
    %83 = vector.load %arg8[%c0_40, %c0_41] : memref<24x16xf32, #tpu.memory_space<vmem>>, vector<24x16xf32>
    %84 = vector.extract_strided_slice %40 {offsets = [0, 16], sizes = [8, 16], strides = [1, 1]} : vector<8x32xf32> to vector<8x16xf32>
    %85 = vector.extract_strided_slice %41 {offsets = [0, 16], sizes = [8, 16], strides = [1, 1]} : vector<8x32xf32> to vector<8x16xf32>
    %cst_42 = arith.constant dense<0.000000e+00> : vector<24x8xf32>
    %86 = tpu.matmul %83, %84, %cst_42 {dimension_numbers = #tpu.dot_dimension_numbers<[1], [1], [0], [0], [0, 0, 1, 0], [], []>} : vector<24x16xf32>, vector<8x16xf32>, vector<24x8xf32> -> vector<24x8xf32>
    %cst_43 = arith.constant 0xFF800000 : f32
    %87 = vector.broadcast %cst_43 : f32 to vector<24x8xf32>
    %88 = arith.select %38, %86, %87 : vector<24x8xi1>, vector<24x8xf32>
    %cst_44 = arith.constant dense<0xFF800000> : vector<24xf32>
    %89 = vector.multi_reduction <maximumf>, %88, %cst_44 [1] : vector<24x8xf32> to vector<24xf32>
    %90 = vector.shape_cast %89 : vector<24xf32> to vector<24x1xf32>
    %91 = vector.broadcast %90 : vector<24x1xf32> to vector<24x8xf32>
    %92 = arith.subf %88, %91 : vector<24x8xf32>
    %93 = math.exp %92 : vector<24x8xf32>
    %cst_45 = arith.constant dense<0.000000e+00> : vector<24xf32>
    %94 = vector.multi_reduction <add>, %93, %cst_45 [1] : vector<24x8xf32> to vector<24xf32>
    %95 = vector.shape_cast %94 : vector<24xf32> to vector<24x1xf32>
    %96 = tpu.reciprocal %95 {approx = true} : vector<24x1xf32> -> vector<24x1xf32>
    %97 = vector.broadcast %96 : vector<24x1xf32> to vector<24x8xf32>
    %98 = arith.mulf %93, %97 : vector<24x8xf32>
    %cst_46 = arith.constant dense<0.000000e+00> : vector<24x16xf32>
    %99 = tpu.matmul %98, %85, %cst_46 {dimension_numbers = #tpu.dot_dimension_numbers<[1], [0], [0], [1], [0, 0, 1, 1], [], []>} : vector<24x8xf32>, vector<8x16xf32>, vector<24x16xf32> -> vector<24x16xf32>
    %100 = vector.extract_strided_slice %99 {offsets = [0, 0], sizes = [8, 16], strides = [1, 1]} : vector<24x16xf32> to vector<8x16xf32>
    %c0_47 = arith.constant 0 : index
    %c0_48 = arith.constant 0 : index
    %101 = vector.load %arg9[%c0_47, %c0_48] : memref<8x48xf32, #tpu.memory_space<vmem>>, vector<8x16xf32>
    tpu.vector_store %arg9[%c0_47, %c0_48], %100 {strides = array<i32>} : memref<8x48xf32, #tpu.memory_space<vmem>>, vector<8x16xf32>,
    %102 = vector.extract_strided_slice %99 {offsets = [8, 0], sizes = [8, 16], strides = [1, 1]} : vector<24x16xf32> to vector<8x16xf32>
    %c0_49 = arith.constant 0 : index
    %c16_50 = arith.constant 16 : index
    %103 = vector.load %arg9[%c0_49, %c16_50] : memref<8x48xf32, #tpu.memory_space<vmem>>, vector<8x16xf32>
    tpu.vector_store %arg9[%c0_49, %c16_50], %102 {strides = array<i32>} : memref<8x48xf32, #tpu.memory_space<vmem>>, vector<8x16xf32>,
    %104 = vector.extract_strided_slice %99 {offsets = [16, 0], sizes = [8, 16], strides = [1, 1]} : vector<24x16xf32> to vector<8x16xf32>
    %c0_51 = arith.constant 0 : index
    %c32_52 = arith.constant 32 : index
    %105 = vector.load %arg9[%c0_51, %c32_52] : memref<8x48xf32, #tpu.memory_space<vmem>>, vector<8x16xf32>
    tpu.vector_store %arg9[%c0_51, %c32_52], %104 {strides = array<i32>} : memref<8x48xf32, #tpu.memory_space<vmem>>, vector<8x16xf32>,
    %c0_53 = arith.constant 0 : index
    %c0_54 = arith.constant 0 : index
    %106 = vector.load %arg9[%c0_53, %c0_54] : memref<8x48xf32, #tpu.memory_space<vmem>>, vector<8x48xf32>
    %107 = arith.truncf %106 : vector<8x48xf32> to vector<8x48xbf16>
    %c48 = arith.constant 48 : index
    %c0_55 = arith.constant 0 : index
    %108 = vector.load %arg6[%c48, %c0_55] : memref<96x96xbf16, #tpu.memory_space<vmem>>, vector<48x96xbf16>
    %cst_56 = arith.constant dense<0.000000e+00> : vector<8x96xf32>
    %109 = tpu.matmul %107, %108, %cst_56 {dimension_numbers = #tpu.dot_dimension_numbers<[1], [0], [0], [1], [0, 0, 1, 1], [], []>} : vector<8x48xbf16>, vector<48x96xbf16>, vector<8x96xf32> -> vector<8x96xf32>
    %110 = arith.addf %76, %109 : vector<8x96xf32>
    %c0_57 = arith.constant 0 : index
    %c0_58 = arith.constant 0 : index
    %111 = vector.load %arg7[%c0_57, %c0_58] : memref<16x96xf32, #tpu.memory_space<vmem>>, vector<8x96xf32>
    tpu.vector_store %arg7[%c0_57, %c0_58], %110 {strides = array<i32>} : memref<16x96xf32, #tpu.memory_space<vmem>>, vector<8x96xf32>,
    %112 = vector.extract_strided_slice %19 {offsets = [8, 0], sizes = [8, 96], strides = [1, 1]} : vector<16x128xf32> to vector<8x96xf32>
    %113 = vector.extract_strided_slice %19 {offsets = [8, 96], sizes = [8, 32], strides = [1, 1]} : vector<16x128xf32> to vector<8x32xf32>
    %114 = vector.extract_strided_slice %5 {offsets = [8, 0], sizes = [8, 32], strides = [1, 1]} : vector<16x32xf32> to vector<8x32xf32>
    %cst_59 = arith.constant 0.000000e+00 : f32
    %115 = vector.broadcast %cst_59 : f32 to vector<8x96xf32>
    %116 = vector.extract_strided_slice %112 {offsets = [0, 0], sizes = [8, 16], strides = [1, 1]} : vector<8x96xf32> to vector<8x16xf32>
    %c0_60 = arith.constant 0 : index
    %c0_61 = arith.constant 0 : index
    %117 = vector.load %arg8[%c0_60, %c0_61] : memref<24x16xf32, #tpu.memory_space<vmem>>, vector<8x16xf32>
    tpu.vector_store %arg8[%c0_60, %c0_61], %116 {strides = array<i32>} : memref<24x16xf32, #tpu.memory_space<vmem>>, vector<8x16xf32>,
    %118 = vector.extract_strided_slice %112 {offsets = [0, 16], sizes = [8, 16], strides = [1, 1]} : vector<8x96xf32> to vector<8x16xf32>
    %c8_62 = arith.constant 8 : index
    %c0_63 = arith.constant 0 : index
    %119 = vector.load %arg8[%c8_62, %c0_63] : memref<24x16xf32, #tpu.memory_space<vmem>>, vector<8x16xf32>
    tpu.vector_store %arg8[%c8_62, %c0_63], %118 {strides = array<i32>} : memref<24x16xf32, #tpu.memory_space<vmem>>, vector<8x16xf32>,
    %120 = vector.extract_strided_slice %112 {offsets = [0, 32], sizes = [8, 16], strides = [1, 1]} : vector<8x96xf32> to vector<8x16xf32>
    %c16_64 = arith.constant 16 : index
    %c0_65 = arith.constant 0 : index
    %121 = vector.load %arg8[%c16_64, %c0_65] : memref<24x16xf32, #tpu.memory_space<vmem>>, vector<8x16xf32>
    tpu.vector_store %arg8[%c16_64, %c0_65], %120 {strides = array<i32>} : memref<24x16xf32, #tpu.memory_space<vmem>>, vector<8x16xf32>,
    %c0_66 = arith.constant 0 : index
    %c0_67 = arith.constant 0 : index
    %122 = vector.load %arg8[%c0_66, %c0_67] : memref<24x16xf32, #tpu.memory_space<vmem>>, vector<24x16xf32>
    %123 = vector.extract_strided_slice %113 {offsets = [0, 0], sizes = [8, 16], strides = [1, 1]} : vector<8x32xf32> to vector<8x16xf32>
    %124 = vector.extract_strided_slice %114 {offsets = [0, 0], sizes = [8, 16], strides = [1, 1]} : vector<8x32xf32> to vector<8x16xf32>
    %cst_68 = arith.constant dense<0.000000e+00> : vector<24x8xf32>
    %125 = tpu.matmul %122, %123, %cst_68 {dimension_numbers = #tpu.dot_dimension_numbers<[1], [1], [0], [0], [0, 0, 1, 0], [], []>} : vector<24x16xf32>, vector<8x16xf32>, vector<24x8xf32> -> vector<24x8xf32>
    %cst_69 = arith.constant 0xFF800000 : f32
    %126 = vector.broadcast %cst_69 : f32 to vector<24x8xf32>
    %127 = arith.select %38, %125, %126 : vector<24x8xi1>, vector<24x8xf32>
    %cst_70 = arith.constant dense<0xFF800000> : vector<24xf32>
    %128 = vector.multi_reduction <maximumf>, %127, %cst_70 [1] : vector<24x8xf32> to vector<24xf32>
    %129 = vector.shape_cast %128 : vector<24xf32> to vector<24x1xf32>
    %130 = vector.broadcast %129 : vector<24x1xf32> to vector<24x8xf32>
    %131 = arith.subf %127, %130 : vector<24x8xf32>
    %132 = math.exp %131 : vector<24x8xf32>
    %cst_71 = arith.constant dense<0.000000e+00> : vector<24xf32>
    %133 = vector.multi_reduction <add>, %132, %cst_71 [1] : vector<24x8xf32> to vector<24xf32>
    %134 = vector.shape_cast %133 : vector<24xf32> to vector<24x1xf32>
    %135 = tpu.reciprocal %134 {approx = true} : vector<24x1xf32> -> vector<24x1xf32>
    %136 = vector.broadcast %135 : vector<24x1xf32> to vector<24x8xf32>
    %137 = arith.mulf %132, %136 : vector<24x8xf32>
    %cst_72 = arith.constant dense<0.000000e+00> : vector<24x16xf32>
    %138 = tpu.matmul %137, %124, %cst_72 {dimension_numbers = #tpu.dot_dimension_numbers<[1], [0], [0], [1], [0, 0, 1, 1], [], []>} : vector<24x8xf32>, vector<8x16xf32>, vector<24x16xf32> -> vector<24x16xf32>
    %139 = vector.extract_strided_slice %138 {offsets = [0, 0], sizes = [8, 16], strides = [1, 1]} : vector<24x16xf32> to vector<8x16xf32>
    %c0_73 = arith.constant 0 : index
    %c0_74 = arith.constant 0 : index
    %140 = vector.load %arg9[%c0_73, %c0_74] : memref<8x48xf32, #tpu.memory_space<vmem>>, vector<8x16xf32>
    tpu.vector_store %arg9[%c0_73, %c0_74], %139 {strides = array<i32>} : memref<8x48xf32, #tpu.memory_space<vmem>>, vector<8x16xf32>,
    %141 = vector.extract_strided_slice %138 {offsets = [8, 0], sizes = [8, 16], strides = [1, 1]} : vector<24x16xf32> to vector<8x16xf32>
    %c0_75 = arith.constant 0 : index
    %c16_76 = arith.constant 16 : index
    %142 = vector.load %arg9[%c0_75, %c16_76] : memref<8x48xf32, #tpu.memory_space<vmem>>, vector<8x16xf32>
    tpu.vector_store %arg9[%c0_75, %c16_76], %141 {strides = array<i32>} : memref<8x48xf32, #tpu.memory_space<vmem>>, vector<8x16xf32>,
    %143 = vector.extract_strided_slice %138 {offsets = [16, 0], sizes = [8, 16], strides = [1, 1]} : vector<24x16xf32> to vector<8x16xf32>
    %c0_77 = arith.constant 0 : index
    %c32_78 = arith.constant 32 : index
    %144 = vector.load %arg9[%c0_77, %c32_78] : memref<8x48xf32, #tpu.memory_space<vmem>>, vector<8x16xf32>
    tpu.vector_store %arg9[%c0_77, %c32_78], %143 {strides = array<i32>} : memref<8x48xf32, #tpu.memory_space<vmem>>, vector<8x16xf32>,
    %c0_79 = arith.constant 0 : index
    %c0_80 = arith.constant 0 : index
    %145 = vector.load %arg9[%c0_79, %c0_80] : memref<8x48xf32, #tpu.memory_space<vmem>>, vector<8x48xf32>
    %146 = arith.truncf %145 : vector<8x48xf32> to vector<8x48xbf16>
    %c0_81 = arith.constant 0 : index
    %c0_82 = arith.constant 0 : index
    %147 = vector.load %arg6[%c0_81, %c0_82] : memref<96x96xbf16, #tpu.memory_space<vmem>>, vector<48x96xbf16>
    %cst_83 = arith.constant dense<0.000000e+00> : vector<8x96xf32>
    %148 = tpu.matmul %146, %147, %cst_83 {dimension_numbers = #tpu.dot_dimension_numbers<[1], [0], [0], [1], [0, 0, 1, 1], [], []>} : vector<8x48xbf16>, vector<48x96xbf16>, vector<8x96xf32> -> vector<8x96xf32>
    %149 = arith.addf %115, %148 : vector<8x96xf32>
    %150 = vector.extract_strided_slice %112 {offsets = [0, 48], sizes = [8, 16], strides = [1, 1]} : vector<8x96xf32> to vector<8x16xf32>
    %c0_84 = arith.constant 0 : index
    %c0_85 = arith.constant 0 : index
    %151 = vector.load %arg8[%c0_84, %c0_85] : memref<24x16xf32, #tpu.memory_space<vmem>>, vector<8x16xf32>
    tpu.vector_store %arg8[%c0_84, %c0_85], %150 {strides = array<i32>} : memref<24x16xf32, #tpu.memory_space<vmem>>, vector<8x16xf32>,
    %152 = vector.extract_strided_slice %112 {offsets = [0, 64], sizes = [8, 16], strides = [1, 1]} : vector<8x96xf32> to vector<8x16xf32>
    %c8_86 = arith.constant 8 : index
    %c0_87 = arith.constant 0 : index
    %153 = vector.load %arg8[%c8_86, %c0_87] : memref<24x16xf32, #tpu.memory_space<vmem>>, vector<8x16xf32>
    tpu.vector_store %arg8[%c8_86, %c0_87], %152 {strides = array<i32>} : memref<24x16xf32, #tpu.memory_space<vmem>>, vector<8x16xf32>,
    %154 = vector.extract_strided_slice %112 {offsets = [0, 80], sizes = [8, 16], strides = [1, 1]} : vector<8x96xf32> to vector<8x16xf32>
    %c16_88 = arith.constant 16 : index
    %c0_89 = arith.constant 0 : index
    %155 = vector.load %arg8[%c16_88, %c0_89] : memref<24x16xf32, #tpu.memory_space<vmem>>, vector<8x16xf32>
    tpu.vector_store %arg8[%c16_88, %c0_89], %154 {strides = array<i32>} : memref<24x16xf32, #tpu.memory_space<vmem>>, vector<8x16xf32>,
    %c0_90 = arith.constant 0 : index
    %c0_91 = arith.constant 0 : index
    %156 = vector.load %arg8[%c0_90, %c0_91] : memref<24x16xf32, #tpu.memory_space<vmem>>, vector<24x16xf32>
    %157 = vector.extract_strided_slice %113 {offsets = [0, 16], sizes = [8, 16], strides = [1, 1]} : vector<8x32xf32> to vector<8x16xf32>
    %158 = vector.extract_strided_slice %114 {offsets = [0, 16], sizes = [8, 16], strides = [1, 1]} : vector<8x32xf32> to vector<8x16xf32>
    %cst_92 = arith.constant dense<0.000000e+00> : vector<24x8xf32>
    %159 = tpu.matmul %156, %157, %cst_92 {dimension_numbers = #tpu.dot_dimension_numbers<[1], [1], [0], [0], [0, 0, 1, 0], [], []>} : vector<24x16xf32>, vector<8x16xf32>, vector<24x8xf32> -> vector<24x8xf32>
    %cst_93 = arith.constant 0xFF800000 : f32
    %160 = vector.broadcast %cst_93 : f32 to vector<24x8xf32>
    %161 = arith.select %38, %159, %160 : vector<24x8xi1>, vector<24x8xf32>
    %cst_94 = arith.constant dense<0xFF800000> : vector<24xf32>
    %162 = vector.multi_reduction <maximumf>, %161, %cst_94 [1] : vector<24x8xf32> to vector<24xf32>
    %163 = vector.shape_cast %162 : vector<24xf32> to vector<24x1xf32>
    %164 = vector.broadcast %163 : vector<24x1xf32> to vector<24x8xf32>
    %165 = arith.subf %161, %164 : vector<24x8xf32>
    %166 = math.exp %165 : vector<24x8xf32>
    %cst_95 = arith.constant dense<0.000000e+00> : vector<24xf32>
    %167 = vector.multi_reduction <add>, %166, %cst_95 [1] : vector<24x8xf32> to vector<24xf32>
    %168 = vector.shape_cast %167 : vector<24xf32> to vector<24x1xf32>
    %169 = tpu.reciprocal %168 {approx = true} : vector<24x1xf32> -> vector<24x1xf32>
    %170 = vector.broadcast %169 : vector<24x1xf32> to vector<24x8xf32>
    %171 = arith.mulf %166, %170 : vector<24x8xf32>
    %cst_96 = arith.constant dense<0.000000e+00> : vector<24x16xf32>
    %172 = tpu.matmul %171, %158, %cst_96 {dimension_numbers = #tpu.dot_dimension_numbers<[1], [0], [0], [1], [0, 0, 1, 1], [], []>} : vector<24x8xf32>, vector<8x16xf32>, vector<24x16xf32> -> vector<24x16xf32>
    %173 = vector.extract_strided_slice %172 {offsets = [0, 0], sizes = [8, 16], strides = [1, 1]} : vector<24x16xf32> to vector<8x16xf32>
    %c0_97 = arith.constant 0 : index
    %c0_98 = arith.constant 0 : index
    %174 = vector.load %arg9[%c0_97, %c0_98] : memref<8x48xf32, #tpu.memory_space<vmem>>, vector<8x16xf32>
    tpu.vector_store %arg9[%c0_97, %c0_98], %173 {strides = array<i32>} : memref<8x48xf32, #tpu.memory_space<vmem>>, vector<8x16xf32>,
    %175 = vector.extract_strided_slice %172 {offsets = [8, 0], sizes = [8, 16], strides = [1, 1]} : vector<24x16xf32> to vector<8x16xf32>
    %c0_99 = arith.constant 0 : index
    %c16_100 = arith.constant 16 : index
    %176 = vector.load %arg9[%c0_99, %c16_100] : memref<8x48xf32, #tpu.memory_space<vmem>>, vector<8x16xf32>
    tpu.vector_store %arg9[%c0_99, %c16_100], %175 {strides = array<i32>} : memref<8x48xf32, #tpu.memory_space<vmem>>, vector<8x16xf32>,
    %177 = vector.extract_strided_slice %172 {offsets = [16, 0], sizes = [8, 16], strides = [1, 1]} : vector<24x16xf32> to vector<8x16xf32>
    %c0_101 = arith.constant 0 : index
    %c32_102 = arith.constant 32 : index
    %178 = vector.load %arg9[%c0_101, %c32_102] : memref<8x48xf32, #tpu.memory_space<vmem>>, vector<8x16xf32>
    tpu.vector_store %arg9[%c0_101, %c32_102], %177 {strides = array<i32>} : memref<8x48xf32, #tpu.memory_space<vmem>>, vector<8x16xf32>,
    %c0_103 = arith.constant 0 : index
    %c0_104 = arith.constant 0 : index
    %179 = vector.load %arg9[%c0_103, %c0_104] : memref<8x48xf32, #tpu.memory_space<vmem>>, vector<8x48xf32>
    %180 = arith.truncf %179 : vector<8x48xf32> to vector<8x48xbf16>
    %c48_105 = arith.constant 48 : index
    %c0_106 = arith.constant 0 : index
    %181 = vector.load %arg6[%c48_105, %c0_106] : memref<96x96xbf16, #tpu.memory_space<vmem>>, vector<48x96xbf16>
    %cst_107 = arith.constant dense<0.000000e+00> : vector<8x96xf32>
    %182 = tpu.matmul %180, %181, %cst_107 {dimension_numbers = #tpu.dot_dimension_numbers<[1], [0], [0], [1], [0, 0, 1, 1], [], []>} : vector<8x48xbf16>, vector<48x96xbf16>, vector<8x96xf32> -> vector<8x96xf32>
    %183 = arith.addf %149, %182 : vector<8x96xf32>
    %c8_108 = arith.constant 8 : index
    %c0_109 = arith.constant 0 : index
    %184 = vector.load %arg7[%c8_108, %c0_109] : memref<16x96xf32, #tpu.memory_space<vmem>>, vector<8x96xf32>
    tpu.vector_store %arg7[%c8_108, %c0_109], %183 {strides = array<i32>} : memref<16x96xf32, #tpu.memory_space<vmem>>, vector<8x96xf32>,
    return
  }
  func.func @transform_0(%arg0: i32) -> (i32, i32) {
    %c0_i32 = arith.constant 0 : i32
    %c0_i32_0 = arith.constant 0 : i32
    return %arg0, %c0_i32 : i32, i32
  }
  func.func @transform_1(%arg0: i32) -> (i32, i32) {
    %c0_i32 = arith.constant 0 : i32
    %c0_i32_0 = arith.constant 0 : i32
    %c0_i32_1 = arith.constant 0 : i32
    return %c0_i32, %c0_i32_0 : i32, i32
  }
  func.func @transform_2(%arg0: i32) -> (i32, i32) {
    %c0_i32 = arith.constant 0 : i32
    %c0_i32_0 = arith.constant 0 : i32
    return %arg0, %c0_i32 : i32, i32
  }
  func.func @transform_3(%arg0: i32) -> (i32, i32) {
    %c0_i32 = arith.constant 0 : i32
    %c0_i32_0 = arith.constant 0 : i32
    return %arg0, %c0_i32 : i32, i32
  }
  func.func @transform_4(%arg0: i32) -> (i32, i32) {
    %c0_i32 = arith.constant 0 : i32
    %c0_i32_0 = arith.constant 0 : i32
    return %arg0, %c0_i32 : i32, i32
  }
  func.func @transform_5(%arg0: i32) -> (i32, i32) {
    %c0_i32 = arith.constant 0 : i32
    %c0_i32_0 = arith.constant 0 : i32
    %c0_i32_1 = arith.constant 0 : i32
    return %c0_i32, %c0_i32_0 : i32, i32
  }
  func.func @transform_6(%arg0: i32) -> (i32, i32) {
    %c0_i32 = arith.constant 0 : i32
    %c0_i32_0 = arith.constant 0 : i32
    return %arg0, %c0_i32 : i32, i32
  }
}

</mosaic_0001>

<llo_original>
// kernel: fn.1
$region0: #{fn.1}
  #allocation0 [shape = 'u32[]', space=smem, size = 0x4, offset = 0x4, fixed_abs, tag = 'smem constant byte address 0x4 - core index']
  #allocation1 [shape = 'u32[144,128]{1,0:T(1,128)}', space=vmem, size = 0x12000, scoped, tag = 'internal scratch']
  #allocation2 [shape = 'f32[24,16]{1,0:T(8,128)}', space=vmem, size = 0x3000, scoped, tag = 'scratch operand']
  #allocation3 [shape = 'f32[8,48]{1,0:T(8,128)}', space=vmem, size = 0x1000, scoped, tag = 'scratch operand']
  %s0 = inlined_call_operand.vmem [shape: f32[16,96], index: 0, kind: input, shape index: {}]
  %s1 = inlined_call_operand.vmem [shape: bf16[96,160], index: 1, kind: input, shape index: {}]
  %s2 = inlined_call_operand.vmem [shape: f32[16,128], index: 2, kind: input, shape index: {}]
  %s3 = inlined_call_operand.vmem [shape: f32[16,128], index: 3, kind: input, shape index: {}]
  %s4 = inlined_call_operand.vmem [shape: f32[16,128], index: 4, kind: input, shape index: {}]
  %s5 = inlined_call_operand.vmem [shape: bf16[96,96], index: 5, kind: input, shape index: {}]
  %s6 = inlined_call_operand.hbm [shape: f32[16,96], index: 6, kind: output, shape index: {}]
  %s7 = sld [smem:[#allocation0]]
  $region34: #{fn.1} parent=0
    _
  %s9 = ssub.s32 1, %s7
  %s10 = scalar_select 0, %s9, %s7
  $region1: #{fn.1} parent=0
    #allocation4 [shape = 'u8[8192]{0}', space=vmem, size = 0x2000, scoped, tag = 'output window, operand 0, single buffered']
    #allocation5 [shape = 's32[1]{0}', space=sflag, size = 0x4, scoped, tag = 'scoped memory for fn.1']
    %11 = vsyncpa [#allocation5], 0
    // Predicated region
    $region2: #{fn.1} parent=1 // pred_check
      _
    $region3: #{fn.1} parent=1 // pred_check_branch
      %13 = sbr.rel (0) target = $region5
    $region4: #{fn.1} parent=1 // pred_region
      _
    $region5: #{fn.1} parent=1 // pred_fallthru
      _
    // Predicated region
    $region6: #{fn.1} parent=1 // pred_check
      _
    $region7: #{fn.1} parent=1 // pred_check_branch
      %15 = sbr.rel (0) target = $region9
    $region8: #{fn.1} parent=1 // pred_region
      _
    $region9: #{fn.1} parent=1 // pred_fallthru
      _
    // Predicated region
    $region10: #{fn.1} parent=1 // pred_check
      _
    $region11: #{fn.1} parent=1 // pred_check_branch
      %17 = sbr.rel (0) target = $region13
    $region12: #{fn.1} parent=1 // pred_region
      _
    $region13: #{fn.1} parent=1 // pred_fallthru
      _
    // Predicated region
    $region14: #{fn.1} parent=1 // pred_check
      _
    $region15: #{fn.1} parent=1 // pred_check_branch
      %19 = sbr.rel (0) target = $region17
    $region16: #{fn.1} parent=1 // pred_region
      _
    $region17: #{fn.1} parent=1 // pred_fallthru
      _
    // Predicated region
    $region18: #{fn.1} parent=1 // pred_check
      _
    $region19: #{fn.1} parent=1 // pred_check_branch
      %21 = sbr.rel (0) target = $region21
    $region20: #{fn.1} parent=1 // pred_region
      _
    $region21: #{fn.1} parent=1 // pred_fallthru
      _
    // Predicated region
    $region22: #{fn.1} parent=1 // pred_check
      _
    $region23: #{fn.1} parent=1 // pred_check_branch
      %23 = sbr.rel (0) target = $region25
    $region24: #{fn.1} parent=1 // pred_region
      _
    $region25: #{fn.1} parent=1 // pred_fallthru
      _
    %v25 = vld [vmem:[%s0] sm:$0xff]
    %v26 = vld [vmem:[%s0 + $0x8] sm:$0xff]
    %v27 = vpack.c.bf16 %v26, %v25
    %v28 = vld [vmem:[%s1] sm:$0xff]
    %v29 = vld [vmem:[%s1 + $0x8] sm:$0xff]
    %v30 = vld [vmem:[%s1 + $0x10] sm:$0xff]
    %v31 = vld [vmem:[%s1 + $0x18] sm:$0xff]
    %v32 = vld [vmem:[%s1 + $0x20] sm:$0xff]
    %v33 = vld [vmem:[%s1 + $0x28] sm:$0xff]
    %v34 = vld [vmem:[%s1 + $0x30] sm:$0xff]
    %v35 = vld [vmem:[%s1 + $0x38] sm:$0xff]
    %v36 = vld [vmem:[%s1 + $0x40] sm:$0xff]
    %v37 = vld [vmem:[%s1 + $0x48] sm:$0xff]
    %v38 = vld [vmem:[%s1 + $0x50] sm:$0xff]
    %v39 = vld [vmem:[%s1 + $0x58] sm:$0xff]
    %v52 = vunpack.c.l.b16 %v28
    %v53 = vunpack.c.h.b16 %v28
    %v54 = vunpack.c.l.b16 %v29
    %v55 = vunpack.c.h.b16 %v29
    %v56 = vunpack.c.l.b16 %v30
    %v57 = vunpack.c.h.b16 %v30
    %v58 = vunpack.c.l.b16 %v31
    %v59 = vunpack.c.h.b16 %v31
    %v60 = vunpack.c.l.b16 %v32
    %v61 = vunpack.c.h.b16 %v32
    %v62 = vunpack.c.l.b16 %v33
    %v63 = vunpack.c.h.b16 %v33
    %v64 = vunpack.c.l.b16 %v34
    %v65 = vunpack.c.h.b16 %v34
    %v66 = vunpack.c.l.b16 %v35
    %v67 = vunpack.c.h.b16 %v35
    %v68 = vunpack.c.l.b16 %v36
    %v69 = vunpack.c.h.b16 %v36
    %v70 = vunpack.c.l.b16 %v37
    %v71 = vunpack.c.h.b16 %v37
    %v72 = vunpack.c.l.b16 %v38
    %v73 = vunpack.c.h.b16 %v38
    %v74 = vunpack.c.l.b16 %v39
    %v75 = vunpack.c.h.b16 %v39
    %v76 = vpack.c.b16 %v54, %v52
    %v77 = vpack.c.b16 %v55, %v53
    %v78 = vpack.c.b16 %v58, %v56
    %v79 = vpack.c.b16 %v59, %v57
    %v80 = vpack.c.b16 %v62, %v60
    %v81 = vpack.c.b16 %v63, %v61
    %v82 = vpack.c.b16 %v66, %v64
    %v83 = vpack.c.b16 %v67, %v65
    %v84 = vpack.c.b16 %v70, %v68
    %v85 = vpack.c.b16 %v71, %v69
    %v86 = vpack.c.b16 %v74, %v72
    %v87 = vpack.c.b16 %v75, %v73
    %vm100 = vcmask 785408
    %v102 = vsel %vm100, %v27, 0
    %104 = vmatprep.subr.bf16.mxu0 %v77
    %105 = vmatpush1.bf16.msra.mxu0 %v76
    %106 = vmatprep.subr.bf16.mxu0 %v79
    %107 = vmatpush1.bf16.msra.mxu0 %v78
    %108 = vmatprep.subr.bf16.mxu0 %v81
    %109 = vmatpush1.bf16.msra.mxu0 %v80
    %110 = vmatprep.subr.bf16.mxu0 %v83
    %111 = vmatpush1.bf16.msra.mxu0 %v82
    %112 = vmatprep.subr.bf16.mxu0 %v85
    %113 = vmatpush1.bf16.msra.mxu0 %v84
    %114 = vmatprep.subr.bf16.mxu0 %v87
    %115 = vmatpush1.bf16.msra.mxu0 %v86
    %116 = vmatprep.subr.bf16.mxu0 0
    %117 = vmatpush1.bf16.msra.mxu0 0
    %118 = vmatprep.subr.bf16.mxu0 0
    %119 = vmatpush1.bf16.msra.mxu0 0
    %120 = vmatprep.subr.bf16.mxu0 0
    %121 = vmatpush1.bf16.msra.mxu0 0
    %122 = vmatprep.subr.bf16.mxu0 0
    %123 = vmatpush1.bf16.msra.mxu0 0
    %124 = vmatprep.subr.bf16.mxu0 0
    %125 = vmatpush1.bf16.msra.mxu0 0
    %126 = vmatprep.subr.bf16.mxu0 0
    %127 = vmatpush1.bf16.msra.mxu0 0
    %128 = vmatprep.subr.bf16.mxu0 0
    %129 = vmatpush1.bf16.msra.mxu0 0
    %130 = vmatprep.subr.bf16.mxu0 0
    %131 = vmatpush1.bf16.msra.mxu0 0
    %132 = vmatprep.subr.bf16.mxu0 0
    %133 = vmatpush1.bf16.msra.mxu0 0
    %134 = vmatprep.subr.bf16.mxu0 0
    %135 = vmatpush1.bf16.msra.mxu0 0
    %136 = vmatprep.mubr.bf16.mxu0 0
    %137 = vmatmul.mubr.bf16.gmra.mrb[0].mxu0 %v102
    %v138 = vpop.f32.mrb[0].mxu0
    %v139 = vadd.f32 0.0, %v138
    %v140 = vpop.f32.mrb[0].mxu0
    %v141 = vadd.f32 0.0, %v140
    %v142 = vpop.f32.mrb[0].mxu0
    %v143 = vadd.f32 0.0, %v142
    %v144 = vpop.f32.mrb[0].mxu0
    %v145 = vadd.f32 0.0, %v144
    %146 = vdwg.mxu0
    %149 = vrot.lane.b32.xlu0 %v139, 120
    %v150 = vpop.permute.xlu0 %149
    %151 = vrot.lane.b32.xlu0 %v143, 120
    %v152 = vpop.permute.xlu0 %151
    %155 = vrot.lane.b32.xlu0 %v139, 8
    %v156 = vpop.permute.xlu0 %155
    %157 = vrot.lane.b32.xlu0 %v143, 8
    %v158 = vpop.permute.xlu0 %157
    %vm161 = vcmask 64512
    %v162 = vld [vmem:[%s2] sm:$0xff]
    %v163 = vld [vmem:[%s2 + $0x8] sm:$0xff]
    %v164 = vmul.f32 %v139, %v162
    %v165 = vmul.f32 %v143, %v163
    %v166 = vld [vmem:[%s3] sm:$0xff]
    %v167 = vld [vmem:[%s3 + $0x8] sm:$0xff]
    %v168 = vmul.f32 %v150, %v166
    %v169 = vmul.f32 %v152, %v167
    %v170 = vadd.f32 %v164, %v168
    %v171 = vadd.f32 %v165, %v169
    %v172 = vld [vmem:[%s4] sm:$0xff]
    %v173 = vld [vmem:[%s4 + $0x8] sm:$0xff]
    %v174 = vmul.f32 %v156, %v172
    %v175 = vmul.f32 %v158, %v173
    %v176 = vadd.f32 %v170, %v174
    %v177 = vadd.f32 %v171, %v175
    %v178 = vlaneseq
    %v179 = vshrl.u32 %v178, 7
    %v180 = vadd.s32 %v179, 8
    %v181 = vadd.s32 %v179, 16
    %vm182 = vcmp.lt.s32.totalorder %v179, 0
    %v183 = vsub.s32 0, %v179
    %v184 = vsel %vm182, %v183, %v179
    %v185 = vshrl.u32 %v184, 3
    %v186 = vand.u32 %v184, 7
    %v187 = vsub.s32 0, %v186
    %v188 = vsel %vm182, %v187, %v186
    %vm189 = vcmp.lt.s32.totalorder %v180, 0
    %v190 = vsub.s32 0, %v180
    %v191 = vsel %vm189, %v190, %v180
    %v192 = vshrl.u32 %v191, 3
    %v193 = vand.u32 %v191, 7
    %v194 = vsub.s32 0, %v193
    %v195 = vsel %vm189, %v194, %v193
    %vm196 = vcmp.lt.s32.totalorder %v181, 0
    %v197 = vsub.s32 0, %v181
    %v198 = vsel %vm196, %v197, %v181
    %v199 = vshrl.u32 %v198, 3
    %v200 = vand.u32 %v198, 7
    %v201 = vsub.s32 0, %v200
    %v202 = vsel %vm196, %v201, %v200
    %vm203 = vcmp.ne.s32.totalorder %v188, 0
    %vm204 = vcmp.ne.s32.totalorder %v195, 0
    %vm205 = vcmp.ne.s32.totalorder %v202, 0
    %vm206 = vcmp.lt.s32.totalorder %v188, 0
    %vm207 = vcmp.lt.s32.totalorder %v195, 0
    %vm208 = vcmp.lt.s32.totalorder %v202, 0
    %vm209 = vmand %vm206, %vm203
    %vm210 = vmand %vm207, %vm204
    %vm211 = vmand %vm208, %vm205
    %v212 = vadd.s32 %v188, 8
    %v213 = vadd.s32 %v195, 8
    %v214 = vadd.s32 %v202, 8
    %v215 = vsel %vm209, %v212, %v188
    %v216 = vsel %vm210, %v213, %v195
    %v217 = vsel %vm211, %v214, %v202
    %v218 = vlaneseq
    %v219 = vand.u32 %v218, 127
    %vm220 = vcmp.le.s32.totalorder %v219, %v215
    %vm221 = vcmp.le.s32.totalorder %v219, %v216
    %vm222 = vcmp.le.s32.totalorder %v219, %v217
    %vm223 = vcmask 130048
    %224 = vst.msk [vmem:[#allocation2] sm:$0xff] %vm223, %v176
    %226 = vrot.lane.b32.xlu0 %v176, 112
    %v227 = vpop.permute.xlu0 %226
    %229 = vst.msk [vmem:[#allocation2 + $0x8] sm:$0xff] %vm223, %v227
    %230 = vrot.lane.b32.xlu0 %v176, 96
    %v231 = vpop.permute.xlu0 %230
    %233 = vst.msk [vmem:[#allocation2 + $0x10] sm:$0xff] %vm223, %v231
    %v234 = vld [vmem:[#allocation2] sm:$0xff]
    %v235 = vld [vmem:[#allocation2 + $0x8] sm:$0xff]
    %v236 = vld [vmem:[#allocation2 + $0x10] sm:$0xff]
    %237 = vrot.lane.b32.xlu0 %v176, 32
    %v238 = vpop.permute.xlu0 %237
    %v240 = vsel %vm223, %v234, 0
    %v243 = vsel %vm223, %v235, 0
    %v246 = vsel %vm223, %v236, 0
    %v248 = vsel %vm223, %v238, 0
    %250 = vmatprep.subr.mxu0 0.0
    %251 = vmatpush1.xpose.msra.mxu0 %v248
    %252 = vmatprep.subr.mxu0 0.0
    %253 = vmatpush1.xpose.msra.mxu0 0.0
    %254 = vmatprep.subr.mxu0 0.0
    %255 = vmatpush1.xpose.msra.mxu0 0.0
    %256 = vmatprep.subr.mxu0 0.0
    %257 = vmatpush1.xpose.msra.mxu0 0.0
    %258 = vmatprep.subr.mxu0 0.0
    %259 = vmatpush1.xpose.msra.mxu0 0.0
    %260 = vmatprep.subr.mxu0 0.0
    %261 = vmatpush1.xpose.msra.mxu0 0.0
    %262 = vmatprep.subr.mxu0 0.0
    %263 = vmatpush1.xpose.msra.mxu0 0.0
    %264 = vmatprep.subr.mxu0 0.0
    %265 = vmatpush1.xpose.msra.mxu0 0.0
    %266 = vmatprep.subr.mxu0 0.0
    %267 = vmatpush1.xpose.msra.mxu0 0.0
    %268 = vmatprep.subr.mxu0 0.0
    %269 = vmatpush1.xpose.msra.mxu0 0.0
    %270 = vmatprep.subr.mxu0 0.0
    %271 = vmatpush1.xpose.msra.mxu0 0.0
    %272 = vmatprep.subr.mxu0 0.0
    %273 = vmatpush1.xpose.msra.mxu0 0.0
    %274 = vmatprep.subr.mxu0 0.0
    %275 = vmatpush1.xpose.msra.mxu0 0.0
    %276 = vmatprep.subr.mxu0 0.0
    %277 = vmatpush1.xpose.msra.mxu0 0.0
    %278 = vmatprep.subr.mxu0 0.0
    %279 = vmatpush1.xpose.msra.mxu0 0.0
    %280 = vmatprep.subr.mxu0 0.0
    %281 = vmatpush1.xpose.msra.mxu0 0.0
    %282 = vmatprep.subr.mxu0 0.0
    %283 = vmatpush1.xpose.msra.mxu0 0.0
    %284 = vmatprep.subr.mxu0 0.0
    %285 = vmatpush1.xpose.msra.mxu0 0.0
    %286 = vmatprep.subr.mxu0 0.0
    %287 = vmatpush1.xpose.msra.mxu0 0.0
    %288 = vmatprep.subr.mxu0 0.0
    %289 = vmatpush1.xpose.msra.mxu0 0.0
    %290 = vmatprep.subr.mxu0 0.0
    %291 = vmatpush1.xpose.msra.mxu0 0.0
    %292 = vmatprep.subr.mxu0 0.0
    %293 = vmatpush1.xpose.msra.mxu0 0.0
    %294 = vmatprep.subr.mxu0 0.0
    %295 = vmatpush1.xpose.msra.mxu0 0.0
    %296 = vmatprep.subr.mxu0 0.0
    %297 = vmatpush1.xpose.msra.mxu0 0.0
    %298 = vmatprep.subr.mxu0 0.0
    %299 = vmatpush1.xpose.msra.mxu0 0.0
    %300 = vmatprep.subr.mxu0 0.0
    %301 = vmatpush1.xpose.msra.mxu0 0.0
    %302 = vmatprep.subr.mxu0 0.0
    %303 = vmatpush1.xpose.msra.mxu0 0.0
    %304 = vmatprep.subr.mxu0 0.0
    %305 = vmatpush1.xpose.msra.mxu0 0.0
    %306 = vmatprep.subr.mxu0 0.0
    %307 = vmatpush1.xpose.msra.mxu0 0.0
    %308 = vmatprep.subr.mxu0 0.0
    %309 = vmatpush1.xpose.msra.mxu0 0.0
    %310 = vmatprep.subr.mxu0 0.0
    %311 = vmatpush1.xpose.msra.mxu0 0.0
    %312 = vmatprep.subr.mxu0 0.0
    %313 = vmatpush1.xpose.msra.mxu0 0.0
    %314 = vmatprep.mubr.f32.mxu0 0.0
    %315 = vmatmul.mubr.f32.gmra.mrb[0].mxu0 %v240
    %v316 = vpop.f32.mrb[0].mxu0
    %v317 = vadd.f32 0.0, %v316
    %v318 = vpop.f32.mrb[0].mxu0
    %319 = vmatprep.mubr.f32.mxu0 0.0
    %320 = vmatmul.mubr.f32.gmra.mrb[0].mxu0 %v243
    %v321 = vpop.f32.mrb[0].mxu0
    %v322 = vadd.f32 0.0, %v321
    %v323 = vpop.f32.mrb[0].mxu0
    %324 = vmatprep.mubr.f32.mxu0 0.0
    %325 = vmatmul.mubr.f32.gmra.mrb[0].mxu0 %v246
    %v326 = vpop.f32.mrb[0].mxu0
    %v327 = vadd.f32 0.0, %v326
    %v328 = vpop.f32.mrb[0].mxu0
    %329 = vdwg.mxu0
    %v330 = vsel %vm220, %v317, -inf
    %v331 = vsel %vm221, %v322, -inf
    %v332 = vsel %vm222, %v327, -inf
    %v333 = vsel %vm161, %v330, -inf
    %334 = vmax.xlane.f32.xlu0 %v333
    %v335 = vpop.xlane.xlu0 %334
    %v336 = vsel %vm161, %v331, -inf
    %337 = vmax.xlane.f32.xlu0 %v336
    %v338 = vpop.xlane.xlu0 %337
    %v339 = vsel %vm161, %v332, -inf
    %340 = vmax.xlane.f32.xlu0 %v339
    %v341 = vpop.xlane.xlu0 %340
    %v342 = vsub.f32 %v330, %v335
    %v343 = vsub.f32 %v331, %v338
    %v344 = vsub.f32 %v332, %v341
    %v345 = vmul.f32 %v342, 1.442695
    %v346 = vpow.pop %v345
    %v347 = vmul.f32 %v343, 1.442695
    %v348 = vpow.pop %v347
    %v349 = vmul.f32 %v344, 1.442695
    %v350 = vpow.pop %v349
    %v351 = vsel %vm161, %v346, 0.0
    %352 = vadd.xlane.f32.xlu0 %v351
    %v353 = vpop.xlane.xlu0 %352
    %v354 = vsel %vm161, %v348, 0.0
    %355 = vadd.xlane.f32.xlu0 %v354
    %v356 = vpop.xlane.xlu0 %355
    %v357 = vsel %vm161, %v350, 0.0
    %358 = vadd.xlane.f32.xlu0 %v357
    %v359 = vpop.xlane.xlu0 %358
    %v360 = vrcp.pop %v353
    %v361 = vrcp.pop %v356
    %v362 = vrcp.pop %v359
    %v363 = vmul.f32 %v346, %v360
    %v364 = vmul.f32 %v348, %v361
    %v365 = vmul.f32 %v350, %v362
    %v367 = vsel %vm161, %v363, 0
    %v370 = vsel %vm161, %v364, 0
    %v373 = vsel %vm161, %v365, 0
    %375 = vmatprep.subr.mxu0 0.0
    %376 = vmatpush1.msra.mxu0 %v141
    %377 = vmatprep.subr.mxu0 0.0
    %378 = vmatpush1.msra.mxu0 0.0
    %379 = vmatprep.subr.mxu0 0.0
    %380 = vmatpush1.msra.mxu0 0.0
    %381 = vmatprep.subr.mxu0 0.0
    %382 = vmatpush1.msra.mxu0 0.0
    %383 = vmatprep.subr.mxu0 0.0
    %384 = vmatpush1.msra.mxu0 0.0
    %385 = vmatprep.subr.mxu0 0.0
    %386 = vmatpush1.msra.mxu0 0.0
    %387 = vmatprep.subr.mxu0 0.0
    %388 = vmatpush1.msra.mxu0 0.0
    %389 = vmatprep.subr.mxu0 0.0
    %390 = vmatpush1.msra.mxu0 0.0
    %391 = vmatprep.subr.mxu0 0.0
    %392 = vmatpush1.msra.mxu0 0.0
    %393 = vmatprep.subr.mxu0 0.0
    %394 = vmatpush1.msra.mxu0 0.0
    %395 = vmatprep.subr.mxu0 0.0
    %396 = vmatpush1.msra.mxu0 0.0
    %397 = vmatprep.subr.mxu0 0.0
    %398 = vmatpush1.msra.mxu0 0.0
    %399 = vmatprep.subr.mxu0 0.0
    %400 = vmatpush1.msra.mxu0 0.0
    %401 = vmatprep.subr.mxu0 0.0
    %402 = vmatpush1.msra.mxu0 0.0
    %403 = vmatprep.subr.mxu0 0.0
    %404 = vmatpush1.msra.mxu0 0.0
    %405 = vmatprep.subr.mxu0 0.0
    %406 = vmatpush1.msra.mxu0 0.0
    %407 = vmatprep.subr.mxu0 0.0
    %408 = vmatpush1.msra.mxu0 0.0
    %409 = vmatprep.subr.mxu0 0.0
    %410 = vmatpush1.msra.mxu0 0.0
    %411 = vmatprep.subr.mxu0 0.0
    %412 = vmatpush1.msra.mxu0 0.0
    %413 = vmatprep.subr.mxu0 0.0
    %414 = vmatpush1.msra.mxu0 0.0
    %415 = vmatprep.subr.mxu0 0.0
    %416 = vmatpush1.msra.mxu0 0.0
    %417 = vmatprep.subr.mxu0 0.0
    %418 = vmatpush1.msra.mxu0 0.0
    %419 = vmatprep.subr.mxu0 0.0
    %420 = vmatpush1.msra.mxu0 0.0
    %421 = vmatprep.subr.mxu0 0.0
    %422 = vmatpush1.msra.mxu0 0.0
    %423 = vmatprep.subr.mxu0 0.0
    %424 = vmatpush1.msra.mxu0 0.0
    %425 = vmatprep.subr.mxu0 0.0
    %426 = vmatpush1.msra.mxu0 0.0
    %427 = vmatprep.subr.mxu0 0.0
    %428 = vmatpush1.msra.mxu0 0.0
    %429 = vmatprep.subr.mxu0 0.0
    %430 = vmatpush1.msra.mxu0 0.0
    %431 = vmatprep.subr.mxu0 0.0
    %432 = vmatpush1.msra.mxu0 0.0
    %433 = vmatprep.subr.mxu0 0.0
    %434 = vmatpush1.msra.mxu0 0.0
    %435 = vmatprep.subr.mxu0 0.0
    %436 = vmatpush1.msra.mxu0 0.0
    %437 = vmatprep.subr.mxu0 0.0
    %438 = vmatpush1.msra.mxu0 0.0
    %439 = vmatprep.mubr.f32.mxu0 0.0
    %440 = vmatmul.mubr.f32.gmra.mrb[0].mxu0 %v367
    %v441 = vpop.f32.mrb[0].mxu0
    %v442 = vadd.f32 0.0, %v441
    %v443 = vpop.f32.mrb[0].mxu0
    %444 = vmatprep.mubr.f32.mxu0 0.0
    %445 = vmatmul.mubr.f32.gmra.mrb[0].mxu0 %v370
    %v446 = vpop.f32.mrb[0].mxu0
    %v447 = vadd.f32 0.0, %v446
    %v448 = vpop.f32.mrb[0].mxu0
    %449 = vmatprep.mubr.f32.mxu0 0.0
    %450 = vmatmul.mubr.f32.gmra.mrb[0].mxu0 %v373
    %v451 = vpop.f32.mrb[0].mxu0
    %v452 = vadd.f32 0.0, %v451
    %v453 = vpop.f32.mrb[0].mxu0
    %454 = vdwg.mxu0
    %455 = vst.msk [vmem:[#allocation3] sm:$0xff] %vm223, %v442
    %457 = vrot.lane.b32.xlu0 %v447, 16
    %v458 = vpop.permute.xlu0 %457
    %vm460 = vcmask 261248
    %461 = vst.msk [vmem:[#allocation3] sm:$0xff] %vm460, %v458
    %463 = vrot.lane.b32.xlu0 %v452, 32
    %v464 = vpop.permute.xlu0 %463
    %vm466 = vcmask 392448
    %467 = vst.msk [vmem:[#allocation3] sm:$0xff] %vm466, %v464
    %v468 = vld [vmem:[#allocation3] sm:$0xff]
    %v469 = vpack.c.bf16 %v468, %v468
    %v470 = vld [vmem:[%s5] sm:$0xf]
    %v471 = vld [vmem:[%s5 + $0x4] sm:$0xf]
    %v472 = vld [vmem:[%s5 + $0x8] sm:$0xf]
    %v473 = vld [vmem:[%s5 + $0xc] sm:$0xf]
    %v474 = vld [vmem:[%s5 + $0x10] sm:$0xf]
    %v475 = vld [vmem:[%s5 + $0x14] sm:$0xf]
    %476 = vrot.lane.b32.xlu0 %v176, 80
    %v477 = vpop.permute.xlu0 %476
    %479 = vst.msk [vmem:[#allocation2] sm:$0xff] %vm223, %v477
    %480 = vrot.lane.b32.xlu0 %v176, 64
    %v481 = vpop.permute.xlu0 %480
    %483 = vst.msk [vmem:[#allocation2 + $0x8] sm:$0xff] %vm223, %v481
    %484 = vrot.lane.b32.xlu0 %v176, 48
    %v485 = vpop.permute.xlu0 %484
    %487 = vst.msk [vmem:[#allocation2 + $0x10] sm:$0xff] %vm223, %v485
    %v488 = vld [vmem:[#allocation2] sm:$0xff]
    %v489 = vld [vmem:[#allocation2 + $0x8] sm:$0xff]
    %v490 = vld [vmem:[#allocation2 + $0x10] sm:$0xff]
    %491 = vrot.lane.b32.xlu0 %v176, 16
    %v492 = vpop.permute.xlu0 %491
    %v494 = vsel %vm223, %v488, 0
    %v497 = vsel %vm223, %v489, 0
    %v500 = vsel %vm223, %v490, 0
    %v502 = vsel %vm223, %v492, 0
    %504 = vmatprep.subr.mxu0 0.0
    %505 = vmatpush1.xpose.msra.mxu0 %v502
    %506 = vmatprep.subr.mxu0 0.0
    %507 = vmatpush1.xpose.msra.mxu0 0.0
    %508 = vmatprep.subr.mxu0 0.0
    %509 = vmatpush1.xpose.msra.mxu0 0.0
    %510 = vmatprep.subr.mxu0 0.0
    %511 = vmatpush1.xpose.msra.mxu0 0.0
    %512 = vmatprep.subr.mxu0 0.0
    %513 = vmatpush1.xpose.msra.mxu0 0.0
    %514 = vmatprep.subr.mxu0 0.0
    %515 = vmatpush1.xpose.msra.mxu0 0.0
    %516 = vmatprep.subr.mxu0 0.0
    %517 = vmatpush1.xpose.msra.mxu0 0.0
    %518 = vmatprep.subr.mxu0 0.0
    %519 = vmatpush1.xpose.msra.mxu0 0.0
    %520 = vmatprep.subr.mxu0 0.0
    %521 = vmatpush1.xpose.msra.mxu0 0.0
    %522 = vmatprep.subr.mxu0 0.0
    %523 = vmatpush1.xpose.msra.mxu0 0.0
    %524 = vmatprep.subr.mxu0 0.0
    %525 = vmatpush1.xpose.msra.mxu0 0.0
    %526 = vmatprep.subr.mxu0 0.0
    %527 = vmatpush1.xpose.msra.mxu0 0.0
    %528 = vmatprep.subr.mxu0 0.0
    %529 = vmatpush1.xpose.msra.mxu0 0.0
    %530 = vmatprep.subr.mxu0 0.0
    %531 = vmatpush1.xpose.msra.mxu0 0.0
    %532 = vmatprep.subr.mxu0 0.0
    %533 = vmatpush1.xpose.msra.mxu0 0.0
    %534 = vmatprep.subr.mxu0 0.0
    %535 = vmatpush1.xpose.msra.mxu0 0.0
    %536 = vmatprep.subr.mxu0 0.0
    %537 = vmatpush1.xpose.msra.mxu0 0.0
    %538 = vmatprep.subr.mxu0 0.0
    %539 = vmatpush1.xpose.msra.mxu0 0.0
    %540 = vmatprep.subr.mxu0 0.0
    %541 = vmatpush1.xpose.msra.mxu0 0.0
    %542 = vmatprep.subr.mxu0 0.0
    %543 = vmatpush1.xpose.msra.mxu0 0.0
    %544 = vmatprep.subr.mxu0 0.0
    %545 = vmatpush1.xpose.msra.mxu0 0.0
    %546 = vmatprep.subr.mxu0 0.0
    %547 = vmatpush1.xpose.msra.mxu0 0.0
    %548 = vmatprep.subr.mxu0 0.0
    %549 = vmatpush1.xpose.msra.mxu0 0.0
    %550 = vmatprep.subr.mxu0 0.0
    %551 = vmatpush1.xpose.msra.mxu0 0.0
    %552 = vmatprep.subr.mxu0 0.0
    %553 = vmatpush1.xpose.msra.mxu0 0.0
    %554 = vmatprep.subr.mxu0 0.0
    %555 = vmatpush1.xpose.msra.mxu0 0.0
    %556 = vmatprep.subr.mxu0 0.0
    %557 = vmatpush1.xpose.msra.mxu0 0.0
    %558 = vmatprep.subr.mxu0 0.0
    %559 = vmatpush1.xpose.msra.mxu0 0.0
    %560 = vmatprep.subr.mxu0 0.0
    %561 = vmatpush1.xpose.msra.mxu0 0.0
    %562 = vmatprep.subr.mxu0 0.0
    %563 = vmatpush1.xpose.msra.mxu0 0.0
    %564 = vmatprep.subr.mxu0 0.0
    %565 = vmatpush1.xpose.msra.mxu0 0.0
    %566 = vmatprep.subr.mxu0 0.0
    %567 = vmatpush1.xpose.msra.mxu0 0.0
    %568 = vmatprep.mubr.f32.mxu0 0.0
    %569 = vmatmul.mubr.f32.gmra.mrb[0].mxu0 %v494
    %v570 = vpop.f32.mrb[0].mxu0
    %v571 = vadd.f32 0.0, %v570
    %v572 = vpop.f32.mrb[0].mxu0
    %573 = vmatprep.mubr.f32.mxu0 0.0
    %574 = vmatmul.mubr.f32.gmra.mrb[0].mxu0 %v497
    %v575 = vpop.f32.mrb[0].mxu0
    %v576 = vadd.f32 0.0, %v575
    %v577 = vpop.f32.mrb[0].mxu0
    %578 = vmatprep.mubr.f32.mxu0 0.0
    %579 = vmatmul.mubr.f32.gmra.mrb[0].mxu0 %v500
    %v580 = vpop.f32.mrb[0].mxu0
    %v581 = vadd.f32 0.0, %v580
    %v582 = vpop.f32.mrb[0].mxu0
    %583 = vdwg.mxu0
    %v584 = vsel %vm220, %v571, -inf
    %v585 = vsel %vm221, %v576, -inf
    %v586 = vsel %vm222, %v581, -inf
    %v587 = vsel %vm161, %v584, -inf
    %588 = vmax.xlane.f32.xlu0 %v587
    %v589 = vpop.xlane.xlu0 %588
    %v590 = vsel %vm161, %v585, -inf
    %591 = vmax.xlane.f32.xlu0 %v590
    %v592 = vpop.xlane.xlu0 %591
    %v593 = vsel %vm161, %v586, -inf
    %594 = vmax.xlane.f32.xlu0 %v593
    %v595 = vpop.xlane.xlu0 %594
    %v596 = vsub.f32 %v584, %v589
    %v597 = vsub.f32 %v585, %v592
    %v598 = vsub.f32 %v586, %v595
    %v599 = vmul.f32 %v596, 1.442695
    %v600 = vpow.pop %v599
    %v601 = vmul.f32 %v597, 1.442695
    %v602 = vpow.pop %v601
    %v603 = vmul.f32 %v598, 1.442695
    %v604 = vpow.pop %v603
    %v605 = vsel %vm161, %v600, 0.0
    %606 = vadd.xlane.f32.xlu0 %v605
    %v607 = vpop.xlane.xlu0 %606
    %v608 = vsel %vm161, %v602, 0.0
    %609 = vadd.xlane.f32.xlu0 %v608
    %v610 = vpop.xlane.xlu0 %609
    %v611 = vsel %vm161, %v604, 0.0
    %612 = vadd.xlane.f32.xlu0 %v611
    %v613 = vpop.xlane.xlu0 %612
    %v614 = vrcp.pop %v607
    %v615 = vrcp.pop %v610
    %v616 = vrcp.pop %v613
    %v617 = vmul.f32 %v600, %v614
    %v618 = vmul.f32 %v602, %v615
    %v619 = vmul.f32 %v604, %v616
    %621 = vrot.lane.b32.xlu0 %v141, 112
    %v622 = vpop.permute.xlu0 %621
    %v625 = vsel %vm161, %v617, 0
    %v628 = vsel %vm161, %v618, 0
    %v631 = vsel %vm161, %v619, 0
    %633 = vmatprep.subr.mxu0 0.0
    %634 = vmatpush1.msra.mxu0 %v622
    %635 = vmatprep.subr.mxu0 0.0
    %636 = vmatpush1.msra.mxu0 0.0
    %637 = vmatprep.subr.mxu0 0.0
    %638 = vmatpush1.msra.mxu0 0.0
    %639 = vmatprep.subr.mxu0 0.0
    %640 = vmatpush1.msra.mxu0 0.0
    %641 = vmatprep.subr.mxu0 0.0
    %642 = vmatpush1.msra.mxu0 0.0
    %643 = vmatprep.subr.mxu0 0.0
    %644 = vmatpush1.msra.mxu0 0.0
    %645 = vmatprep.subr.mxu0 0.0
    %646 = vmatpush1.msra.mxu0 0.0
    %647 = vmatprep.subr.mxu0 0.0
    %648 = vmatpush1.msra.mxu0 0.0
    %649 = vmatprep.subr.mxu0 0.0
    %650 = vmatpush1.msra.mxu0 0.0
    %651 = vmatprep.subr.mxu0 0.0
    %652 = vmatpush1.msra.mxu0 0.0
    %653 = vmatprep.subr.mxu0 0.0
    %654 = vmatpush1.msra.mxu0 0.0
    %655 = vmatprep.subr.mxu0 0.0
    %656 = vmatpush1.msra.mxu0 0.0
    %657 = vmatprep.subr.mxu0 0.0
    %658 = vmatpush1.msra.mxu0 0.0
    %659 = vmatprep.subr.mxu0 0.0
    %660 = vmatpush1.msra.mxu0 0.0
    %661 = vmatprep.subr.mxu0 0.0
    %662 = vmatpush1.msra.mxu0 0.0
    %663 = vmatprep.subr.mxu0 0.0
    %664 = vmatpush1.msra.mxu0 0.0
    %665 = vmatprep.subr.mxu0 0.0
    %666 = vmatpush1.msra.mxu0 0.0
    %667 = vmatprep.subr.mxu0 0.0
    %668 = vmatpush1.msra.mxu0 0.0
    %669 = vmatprep.subr.mxu0 0.0
    %670 = vmatpush1.msra.mxu0 0.0
    %671 = vmatprep.subr.mxu0 0.0
    %672 = vmatpush1.msra.mxu0 0.0
    %673 = vmatprep.subr.mxu0 0.0
    %674 = vmatpush1.msra.mxu0 0.0
    %675 = vmatprep.subr.mxu0 0.0
    %676 = vmatpush1.msra.mxu0 0.0
    %677 = vmatprep.subr.mxu0 0.0
    %678 = vmatpush1.msra.mxu0 0.0
    %679 = vmatprep.subr.mxu0 0.0
    %680 = vmatpush1.msra.mxu0 0.0
    %681 = vmatprep.subr.mxu0 0.0
    %682 = vmatpush1.msra.mxu0 0.0
    %683 = vmatprep.subr.mxu0 0.0
    %684 = vmatpush1.msra.mxu0 0.0
    %685 = vmatprep.subr.mxu0 0.0
    %686 = vmatpush1.msra.mxu0 0.0
    %687 = vmatprep.subr.mxu0 0.0
    %688 = vmatpush1.msra.mxu0 0.0
    %689 = vmatprep.subr.mxu0 0.0
    %690 = vmatpush1.msra.mxu0 0.0
    %691 = vmatprep.subr.mxu0 0.0
    %692 = vmatpush1.msra.mxu0 0.0
    %693 = vmatprep.subr.mxu0 0.0
    %694 = vmatpush1.msra.mxu0 0.0
    %695 = vmatprep.subr.mxu0 0.0
    %696 = vmatpush1.msra.mxu0 0.0
    %697 = vmatprep.mubr.f32.mxu0 0.0
    %698 = vmatmul.mubr.f32.gmra.mrb[0].mxu0 %v625
    %v699 = vpop.f32.mrb[0].mxu0
    %v700 = vadd.f32 0.0, %v699
    %v701 = vpop.f32.mrb[0].mxu0
    %702 = vmatprep.mubr.f32.mxu0 0.0
    %703 = vmatmul.mubr.f32.gmra.mrb[0].mxu0 %v628
    %v704 = vpop.f32.mrb[0].mxu0
    %v705 = vadd.f32 0.0, %v704
    %v706 = vpop.f32.mrb[0].mxu0
    %707 = vmatprep.mubr.f32.mxu0 0.0
    %708 = vmatmul.mubr.f32.gmra.mrb[0].mxu0 %v631
    %v709 = vpop.f32.mrb[0].mxu0
    %v710 = vadd.f32 0.0, %v709
    %v711 = vpop.f32.mrb[0].mxu0
    %712 = vdwg.mxu0
    %713 = vst.msk [vmem:[#allocation3] sm:$0xff] %vm223, %v700
    %715 = vrot.lane.b32.xlu0 %v705, 16
    %v716 = vpop.permute.xlu0 %715
    %718 = vst.msk [vmem:[#allocation3] sm:$0xff] %vm460, %v716
    %720 = vrot.lane.b32.xlu0 %v710, 32
    %v721 = vpop.permute.xlu0 %720
    %723 = vst.msk [vmem:[#allocation3] sm:$0xff] %vm466, %v721
    %v724 = vld [vmem:[#allocation3] sm:$0xff]
    %v725 = vpack.c.bf16 %v724, %v724
    %v726 = vld [vmem:[%s5 + $0x18] sm:$0xf]
    %v727 = vld [vmem:[%s5 + $0x1c] sm:$0xf]
    %v728 = vld [vmem:[%s5 + $0x20] sm:$0xf]
    %v729 = vld [vmem:[%s5 + $0x24] sm:$0xf]
    %v730 = vld [vmem:[%s5 + $0x28] sm:$0xf]
    %v731 = vld [vmem:[%s5 + $0x2c] sm:$0xf]
    %v738 = vunpack.c.l.b16 %v726
    %v739 = vunpack.c.l.b16 %v727
    %v740 = vunpack.c.l.b16 %v728
    %v741 = vunpack.c.l.b16 %v729
    %v742 = vunpack.c.l.b16 %v730
    %v743 = vunpack.c.l.b16 %v731
    %v744 = vpack.c.b16 %v739, %v738
    %v745 = vpack.c.b16 %v741, %v740
    %v746 = vpack.c.b16 %v743, %v742
    %vm750 = vcmask 392192
    %v752 = vsel %vm750, %v725, 0
    %754 = vmatprep.subr.bf16.mxu0 0
    %755 = vmatpush1.bf16.msra.mxu0 %v744
    %756 = vmatprep.subr.bf16.mxu0 0
    %757 = vmatpush1.bf16.msra.mxu0 %v745
    %758 = vmatprep.subr.bf16.mxu0 0
    %759 = vmatpush1.bf16.msra.mxu0 %v746
    %760 = vmatprep.subr.bf16.mxu0 0
    %761 = vmatpush1.bf16.msra.mxu0 0
    %762 = vmatprep.subr.bf16.mxu0 0
    %763 = vmatpush1.bf16.msra.mxu0 0
    %764 = vmatprep.subr.bf16.mxu0 0
    %765 = vmatpush1.bf16.msra.mxu0 0
    %766 = vmatprep.subr.bf16.mxu0 0
    %767 = vmatpush1.bf16.msra.mxu0 0
    %768 = vmatprep.subr.bf16.mxu0 0
    %769 = vmatpush1.bf16.msra.mxu0 0
    %770 = vmatprep.subr.bf16.mxu0 0
    %771 = vmatpush1.bf16.msra.mxu0 0
    %772 = vmatprep.subr.bf16.mxu0 0
    %773 = vmatpush1.bf16.msra.mxu0 0
    %774 = vmatprep.subr.bf16.mxu0 0
    %775 = vmatpush1.bf16.msra.mxu0 0
    %776 = vmatprep.subr.bf16.mxu0 0
    %777 = vmatpush1.bf16.msra.mxu0 0
    %778 = vmatprep.subr.bf16.mxu0 0
    %779 = vmatpush1.bf16.msra.mxu0 0
    %780 = vmatprep.subr.bf16.mxu0 0
    %781 = vmatpush1.bf16.msra.mxu0 0
    %782 = vmatprep.subr.bf16.mxu0 0
    %783 = vmatpush1.bf16.msra.mxu0 0
    %784 = vmatprep.subr.bf16.mxu0 0
    %785 = vmatpush1.bf16.msra.mxu0 0
    %786 = vmatprep.mubr.bf16.mxu0 0
    %787 = vmatmul.mubr.bf16.gmra.mrb[0].mxu0 %v752
    %v788 = vpop.f32.mrb[0].mxu0
    %v789 = vadd.f32 0.0, %v788
    %v790 = vpop.f32.mrb[0].mxu0
    %v791 = vpop.f32.mrb[0].mxu0
    %v792 = vpop.f32.mrb[0].mxu0
    %793 = vdwg.mxu0
    %v800 = vunpack.c.l.b16 %v470
    %v801 = vunpack.c.l.b16 %v471
    %v802 = vunpack.c.l.b16 %v472
    %v803 = vunpack.c.l.b16 %v473
    %v804 = vunpack.c.l.b16 %v474
    %v805 = vunpack.c.l.b16 %v475
    %v806 = vpack.c.b16 %v801, %v800
    %v807 = vpack.c.b16 %v803, %v802
    %v808 = vpack.c.b16 %v805, %v804
    %v813 = vsel %vm750, %v469, 0
    %815 = vmatprep.subr.bf16.mxu0 0
    %816 = vmatpush1.bf16.msra.mxu0 %v806
    %817 = vmatprep.subr.bf16.mxu0 0
    %818 = vmatpush1.bf16.msra.mxu0 %v807
    %819 = vmatprep.subr.bf16.mxu0 0
    %820 = vmatpush1.bf16.msra.mxu0 %v808
    %821 = vmatprep.subr.bf16.mxu0 0
    %822 = vmatpush1.bf16.msra.mxu0 0
    %823 = vmatprep.subr.bf16.mxu0 0
    %824 = vmatpush1.bf16.msra.mxu0 0
    %825 = vmatprep.subr.bf16.mxu0 0
    %826 = vmatpush1.bf16.msra.mxu0 0
    %827 = vmatprep.subr.bf16.mxu0 0
    %828 = vmatpush1.bf16.msra.mxu0 0
    %829 = vmatprep.subr.bf16.mxu0 0
    %830 = vmatpush1.bf16.msra.mxu0 0
    %831 = vmatprep.subr.bf16.mxu0 0
    %832 = vmatpush1.bf16.msra.mxu0 0
    %833 = vmatprep.subr.bf16.mxu0 0
    %834 = vmatpush1.bf16.msra.mxu0 0
    %835 = vmatprep.subr.bf16.mxu0 0
    %836 = vmatpush1.bf16.msra.mxu0 0
    %837 = vmatprep.subr.bf16.mxu0 0
    %838 = vmatpush1.bf16.msra.mxu0 0
    %839 = vmatprep.subr.bf16.mxu0 0
    %840 = vmatpush1.bf16.msra.mxu0 0
    %841 = vmatprep.subr.bf16.mxu0 0
    %842 = vmatpush1.bf16.msra.mxu0 0
    %843 = vmatprep.subr.bf16.mxu0 0
    %844 = vmatpush1.bf16.msra.mxu0 0
    %845 = vmatprep.subr.bf16.mxu0 0
    %846 = vmatpush1.bf16.msra.mxu0 0
    %847 = vmatprep.mubr.bf16.mxu0 0
    %848 = vmatmul.mubr.bf16.gmra.mrb[0].mxu0 %v813
    %v849 = vpop.f32.mrb[0].mxu0
    %v850 = vadd.f32 %v789, %v849
    %v851 = vpop.f32.mrb[0].mxu0
    %v852 = vpop.f32.mrb[0].mxu0
    %v853 = vpop.f32.mrb[0].mxu0
    %854 = vdwg.mxu0
    %855 = vst.msk [vmem:[#allocation4] sm:$0xff] %vm100, %v850
    %856 = vst.msk [vmem:[#allocation2] sm:$0xff] %vm223, %v177
    %858 = vrot.lane.b32.xlu0 %v177, 112
    %v859 = vpop.permute.xlu0 %858
    %861 = vst.msk [vmem:[#allocation2 + $0x8] sm:$0xff] %vm223, %v859
    %862 = vrot.lane.b32.xlu0 %v177, 96
    %v863 = vpop.permute.xlu0 %862
    %865 = vst.msk [vmem:[#allocation2 + $0x10] sm:$0xff] %vm223, %v863
    %v866 = vld [vmem:[#allocation2] sm:$0xff]
    %v867 = vld [vmem:[#allocation2 + $0x8] sm:$0xff]
    %v868 = vld [vmem:[#allocation2 + $0x10] sm:$0xff]
    %869 = vrot.lane.b32.xlu0 %v177, 32
    %v870 = vpop.permute.xlu0 %869
    %v872 = vsel %vm223, %v866, 0
    %v875 = vsel %vm223, %v867, 0
    %v878 = vsel %vm223, %v868, 0
    %v880 = vsel %vm223, %v870, 0
    %882 = vmatprep.subr.mxu0 0.0
    %883 = vmatpush1.xpose.msra.mxu0 %v880
    %884 = vmatprep.subr.mxu0 0.0
    %885 = vmatpush1.xpose.msra.mxu0 0.0
    %886 = vmatprep.subr.mxu0 0.0
    %887 = vmatpush1.xpose.msra.mxu0 0.0
    %888 = vmatprep.subr.mxu0 0.0
    %889 = vmatpush1.xpose.msra.mxu0 0.0
    %890 = vmatprep.subr.mxu0 0.0
    %891 = vmatpush1.xpose.msra.mxu0 0.0
    %892 = vmatprep.subr.mxu0 0.0
    %893 = vmatpush1.xpose.msra.mxu0 0.0
    %894 = vmatprep.subr.mxu0 0.0
    %895 = vmatpush1.xpose.msra.mxu0 0.0
    %896 = vmatprep.subr.mxu0 0.0
    %897 = vmatpush1.xpose.msra.mxu0 0.0
    %898 = vmatprep.subr.mxu0 0.0
    %899 = vmatpush1.xpose.msra.mxu0 0.0
    %900 = vmatprep.subr.mxu0 0.0
    %901 = vmatpush1.xpose.msra.mxu0 0.0
    %902 = vmatprep.subr.mxu0 0.0
    %903 = vmatpush1.xpose.msra.mxu0 0.0
    %904 = vmatprep.subr.mxu0 0.0
    %905 = vmatpush1.xpose.msra.mxu0 0.0
    %906 = vmatprep.subr.mxu0 0.0
    %907 = vmatpush1.xpose.msra.mxu0 0.0
    %908 = vmatprep.subr.mxu0 0.0
    %909 = vmatpush1.xpose.msra.mxu0 0.0
    %910 = vmatprep.subr.mxu0 0.0
    %911 = vmatpush1.xpose.msra.mxu0 0.0
    %912 = vmatprep.subr.mxu0 0.0
    %913 = vmatpush1.xpose.msra.mxu0 0.0
    %914 = vmatprep.subr.mxu0 0.0
    %915 = vmatpush1.xpose.msra.mxu0 0.0
    %916 = vmatprep.subr.mxu0 0.0
    %917 = vmatpush1.xpose.msra.mxu0 0.0
    %918 = vmatprep.subr.mxu0 0.0
    %919 = vmatpush1.xpose.msra.mxu0 0.0
    %920 = vmatprep.subr.mxu0 0.0
    %921 = vmatpush1.xpose.msra.mxu0 0.0
    %922 = vmatprep.subr.mxu0 0.0
    %923 = vmatpush1.xpose.msra.mxu0 0.0
    %924 = vmatprep.subr.mxu0 0.0
    %925 = vmatpush1.xpose.msra.mxu0 0.0
    %926 = vmatprep.subr.mxu0 0.0
    %927 = vmatpush1.xpose.msra.mxu0 0.0
    %928 = vmatprep.subr.mxu0 0.0
    %929 = vmatpush1.xpose.msra.mxu0 0.0
    %930 = vmatprep.subr.mxu0 0.0
    %931 = vmatpush1.xpose.msra.mxu0 0.0
    %932 = vmatprep.subr.mxu0 0.0
    %933 = vmatpush1.xpose.msra.mxu0 0.0
    %934 = vmatprep.subr.mxu0 0.0
    %935 = vmatpush1.xpose.msra.mxu0 0.0
    %936 = vmatprep.subr.mxu0 0.0
    %937 = vmatpush1.xpose.msra.mxu0 0.0
    %938 = vmatprep.subr.mxu0 0.0
    %939 = vmatpush1.xpose.msra.mxu0 0.0
    %940 = vmatprep.subr.mxu0 0.0
    %941 = vmatpush1.xpose.msra.mxu0 0.0
    %942 = vmatprep.subr.mxu0 0.0
    %943 = vmatpush1.xpose.msra.mxu0 0.0
    %944 = vmatprep.subr.mxu0 0.0
    %945 = vmatpush1.xpose.msra.mxu0 0.0
    %946 = vmatprep.mubr.f32.mxu0 0.0
    %947 = vmatmul.mubr.f32.gmra.mrb[0].mxu0 %v872
    %v948 = vpop.f32.mrb[0].mxu0
    %v949 = vadd.f32 0.0, %v948
    %v950 = vpop.f32.mrb[0].mxu0
    %951 = vmatprep.mubr.f32.mxu0 0.0
    %952 = vmatmul.mubr.f32.gmra.mrb[0].mxu0 %v875
    %v953 = vpop.f32.mrb[0].mxu0
    %v954 = vadd.f32 0.0, %v953
    %v955 = vpop.f32.mrb[0].mxu0
    %956 = vmatprep.mubr.f32.mxu0 0.0
    %957 = vmatmul.mubr.f32.gmra.mrb[0].mxu0 %v878
    %v958 = vpop.f32.mrb[0].mxu0
    %v959 = vadd.f32 0.0, %v958
    %v960 = vpop.f32.mrb[0].mxu0
    %961 = vdwg.mxu0
    %v962 = vsel %vm220, %v949, -inf
    %v963 = vsel %vm221, %v954, -inf
    %v964 = vsel %vm222, %v959, -inf
    %v965 = vsel %vm161, %v962, -inf
    %966 = vmax.xlane.f32.xlu0 %v965
    %v967 = vpop.xlane.xlu0 %966
    %v968 = vsel %vm161, %v963, -inf
    %969 = vmax.xlane.f32.xlu0 %v968
    %v970 = vpop.xlane.xlu0 %969
    %v971 = vsel %vm161, %v964, -inf
    %972 = vmax.xlane.f32.xlu0 %v971
    %v973 = vpop.xlane.xlu0 %972
    %v974 = vsub.f32 %v962, %v967
    %v975 = vsub.f32 %v963, %v970
    %v976 = vsub.f32 %v964, %v973
    %v977 = vmul.f32 %v974, 1.442695
    %v978 = vpow.pop %v977
    %v979 = vmul.f32 %v975, 1.442695
    %v980 = vpow.pop %v979
    %v981 = vmul.f32 %v976, 1.442695
    %v982 = vpow.pop %v981
    %v983 = vsel %vm161, %v978, 0.0
    %984 = vadd.xlane.f32.xlu0 %v983
    %v985 = vpop.xlane.xlu0 %984
    %v986 = vsel %vm161, %v980, 0.0
    %987 = vadd.xlane.f32.xlu0 %v986
    %v988 = vpop.xlane.xlu0 %987
    %v989 = vsel %vm161, %v982, 0.0
    %990 = vadd.xlane.f32.xlu0 %v989
    %v991 = vpop.xlane.xlu0 %990
    %v992 = vrcp.pop %v985
    %v993 = vrcp.pop %v988
    %v994 = vrcp.pop %v991
    %v995 = vmul.f32 %v978, %v992
    %v996 = vmul.f32 %v980, %v993
    %v997 = vmul.f32 %v982, %v994
    %v999 = vsel %vm161, %v995, 0
    %v1002 = vsel %vm161, %v996, 0
    %v1005 = vsel %vm161, %v997, 0
    %1007 = vmatprep.subr.mxu0 0.0
    %1008 = vmatpush1.msra.mxu0 %v145
    %1009 = vmatprep.subr.mxu0 0.0
    %1010 = vmatpush1.msra.mxu0 0.0
    %1011 = vmatprep.subr.mxu0 0.0
    %1012 = vmatpush1.msra.mxu0 0.0
    %1013 = vmatprep.subr.mxu0 0.0
    %1014 = vmatpush1.msra.mxu0 0.0
    %1015 = vmatprep.subr.mxu0 0.0
    %1016 = vmatpush1.msra.mxu0 0.0
    %1017 = vmatprep.subr.mxu0 0.0
    %1018 = vmatpush1.msra.mxu0 0.0
    %1019 = vmatprep.subr.mxu0 0.0
    %1020 = vmatpush1.msra.mxu0 0.0
    %1021 = vmatprep.subr.mxu0 0.0
    %1022 = vmatpush1.msra.mxu0 0.0
    %1023 = vmatprep.subr.mxu0 0.0
    %1024 = vmatpush1.msra.mxu0 0.0
    %1025 = vmatprep.subr.mxu0 0.0
    %1026 = vmatpush1.msra.mxu0 0.0
    %1027 = vmatprep.subr.mxu0 0.0
    %1028 = vmatpush1.msra.mxu0 0.0
    %1029 = vmatprep.subr.mxu0 0.0
    %1030 = vmatpush1.msra.mxu0 0.0
    %1031 = vmatprep.subr.mxu0 0.0
    %1032 = vmatpush1.msra.mxu0 0.0
    %1033 = vmatprep.subr.mxu0 0.0
    %1034 = vmatpush1.msra.mxu0 0.0
    %1035 = vmatprep.subr.mxu0 0.0
    %1036 = vmatpush1.msra.mxu0 0.0
    %1037 = vmatprep.subr.mxu0 0.0
    %1038 = vmatpush1.msra.mxu0 0.0
    %1039 = vmatprep.subr.mxu0 0.0
    %1040 = vmatpush1.msra.mxu0 0.0
    %1041 = vmatprep.subr.mxu0 0.0
    %1042 = vmatpush1.msra.mxu0 0.0
    %1043 = vmatprep.subr.mxu0 0.0
    %1044 = vmatpush1.msra.mxu0 0.0
    %1045 = vmatprep.subr.mxu0 0.0
    %1046 = vmatpush1.msra.mxu0 0.0
    %1047 = vmatprep.subr.mxu0 0.0
    %1048 = vmatpush1.msra.mxu0 0.0
    %1049 = vmatprep.subr.mxu0 0.0
    %1050 = vmatpush1.msra.mxu0 0.0
    %1051 = vmatprep.subr.mxu0 0.0
    %1052 = vmatpush1.msra.mxu0 0.0
    %1053 = vmatprep.subr.mxu0 0.0
    %1054 = vmatpush1.msra.mxu0 0.0
    %1055 = vmatprep.subr.mxu0 0.0
    %1056 = vmatpush1.msra.mxu0 0.0
    %1057 = vmatprep.subr.mxu0 0.0
    %1058 = vmatpush1.msra.mxu0 0.0
    %1059 = vmatprep.subr.mxu0 0.0
    %1060 = vmatpush1.msra.mxu0 0.0
    %1061 = vmatprep.subr.mxu0 0.0
    %1062 = vmatpush1.msra.mxu0 0.0
    %1063 = vmatprep.subr.mxu0 0.0
    %1064 = vmatpush1.msra.mxu0 0.0
    %1065 = vmatprep.subr.mxu0 0.0
    %1066 = vmatpush1.msra.mxu0 0.0
    %1067 = vmatprep.subr.mxu0 0.0
    %1068 = vmatpush1.msra.mxu0 0.0
    %1069 = vmatprep.subr.mxu0 0.0
    %1070 = vmatpush1.msra.mxu0 0.0
    %1071 = vmatprep.mubr.f32.mxu0 0.0
    %1072 = vmatmul.mubr.f32.gmra.mrb[0].mxu0 %v999
    %v1073 = vpop.f32.mrb[0].mxu0
    %v1074 = vadd.f32 0.0, %v1073
    %v1075 = vpop.f32.mrb[0].mxu0
    %1076 = vmatprep.mubr.f32.mxu0 0.0
    %1077 = vmatmul.mubr.f32.gmra.mrb[0].mxu0 %v1002
    %v1078 = vpop.f32.mrb[0].mxu0
    %v1079 = vadd.f32 0.0, %v1078
    %v1080 = vpop.f32.mrb[0].mxu0
    %1081 = vmatprep.mubr.f32.mxu0 0.0
    %1082 = vmatmul.mubr.f32.gmra.mrb[0].mxu0 %v1005
    %v1083 = vpop.f32.mrb[0].mxu0
    %v1084 = vadd.f32 0.0, %v1083
    %v1085 = vpop.f32.mrb[0].mxu0
    %1086 = vdwg.mxu0
    %1087 = vst.msk [vmem:[#allocation3] sm:$0xff] %vm223, %v1074
    %1089 = vrot.lane.b32.xlu0 %v1079, 16
    %v1090 = vpop.permute.xlu0 %1089
    %1092 = vst.msk [vmem:[#allocation3] sm:$0xff] %vm460, %v1090
    %1094 = vrot.lane.b32.xlu0 %v1084, 32
    %v1095 = vpop.permute.xlu0 %1094
    %1097 = vst.msk [vmem:[#allocation3] sm:$0xff] %vm466, %v1095
    %v1098 = vld [vmem:[#allocation3] sm:$0xff]
    %v1099 = vpack.c.bf16 %v1098, %v1098
    %v1100 = vld [vmem:[%s5] sm:$0xf]
    %v1101 = vld [vmem:[%s5 + $0x4] sm:$0xf]
    %v1102 = vld [vmem:[%s5 + $0x8] sm:$0xf]
    %v1103 = vld [vmem:[%s5 + $0xc] sm:$0xf]
    %v1104 = vld [vmem:[%s5 + $0x10] sm:$0xf]
    %v1105 = vld [vmem:[%s5 + $0x14] sm:$0xf]
    %1106 = vrot.lane.b32.xlu0 %v177, 80
    %v1107 = vpop.permute.xlu0 %1106
    %1109 = vst.msk [vmem:[#allocation2] sm:$0xff] %vm223, %v1107
    %1110 = vrot.lane.b32.xlu0 %v177, 64
    %v1111 = vpop.permute.xlu0 %1110
    %1113 = vst.msk [vmem:[#allocation2 + $0x8] sm:$0xff] %vm223, %v1111
    %1114 = vrot.lane.b32.xlu0 %v177, 48
    %v1115 = vpop.permute.xlu0 %1114
    %1117 = vst.msk [vmem:[#allocation2 + $0x10] sm:$0xff] %vm223, %v1115
    %v1118 = vld [vmem:[#allocation2] sm:$0xff]
    %v1119 = vld [vmem:[#allocation2 + $0x8] sm:$0xff]
    %v1120 = vld [vmem:[#allocation2 + $0x10] sm:$0xff]
    %1121 = vrot.lane.b32.xlu0 %v177, 16
    %v1122 = vpop.permute.xlu0 %1121
    %v1124 = vsel %vm223, %v1118, 0
    %v1127 = vsel %vm223, %v1119, 0
    %v1130 = vsel %vm223, %v1120, 0
    %v1132 = vsel %vm223, %v1122, 0
    %1134 = vmatprep.subr.mxu0 0.0
    %1135 = vmatpush1.xpose.msra.mxu0 %v1132
    %1136 = vmatprep.subr.mxu0 0.0
    %1137 = vmatpush1.xpose.msra.mxu0 0.0
    %1138 = vmatprep.subr.mxu0 0.0
    %1139 = vmatpush1.xpose.msra.mxu0 0.0
    %1140 = vmatprep.subr.mxu0 0.0
    %1141 = vmatpush1.xpose.msra.mxu0 0.0
    %1142 = vmatprep.subr.mxu0 0.0
    %1143 = vmatpush1.xpose.msra.mxu0 0.0
    %1144 = vmatprep.subr.mxu0 0.0
    %1145 = vmatpush1.xpose.msra.mxu0 0.0
    %1146 = vmatprep.subr.mxu0 0.0
    %1147 = vmatpush1.xpose.msra.mxu0 0.0
    %1148 = vmatprep.subr.mxu0 0.0
    %1149 = vmatpush1.xpose.msra.mxu0 0.0
    %1150 = vmatprep.subr.mxu0 0.0
    %1151 = vmatpush1.xpose.msra.mxu0 0.0
    %1152 = vmatprep.subr.mxu0 0.0
    %1153 = vmatpush1.xpose.msra.mxu0 0.0
    %1154 = vmatprep.subr.mxu0 0.0
    %1155 = vmatpush1.xpose.msra.mxu0 0.0
    %1156 = vmatprep.subr.mxu0 0.0
    %1157 = vmatpush1.xpose.msra.mxu0 0.0
    %1158 = vmatprep.subr.mxu0 0.0
    %1159 = vmatpush1.xpose.msra.mxu0 0.0
    %1160 = vmatprep.subr.mxu0 0.0
    %1161 = vmatpush1.xpose.msra.mxu0 0.0
    %1162 = vmatprep.subr.mxu0 0.0
    %1163 = vmatpush1.xpose.msra.mxu0 0.0
    %1164 = vmatprep.subr.mxu0 0.0
    %1165 = vmatpush1.xpose.msra.mxu0 0.0
    %1166 = vmatprep.subr.mxu0 0.0
    %1167 = vmatpush1.xpose.msra.mxu0 0.0
    %1168 = vmatprep.subr.mxu0 0.0
    %1169 = vmatpush1.xpose.msra.mxu0 0.0
    %1170 = vmatprep.subr.mxu0 0.0
    %1171 = vmatpush1.xpose.msra.mxu0 0.0
    %1172 = vmatprep.subr.mxu0 0.0
    %1173 = vmatpush1.xpose.msra.mxu0 0.0
    %1174 = vmatprep.subr.mxu0 0.0
    %1175 = vmatpush1.xpose.msra.mxu0 0.0
    %1176 = vmatprep.subr.mxu0 0.0
    %1177 = vmatpush1.xpose.msra.mxu0 0.0
    %1178 = vmatprep.subr.mxu0 0.0
    %1179 = vmatpush1.xpose.msra.mxu0 0.0
    %1180 = vmatprep.subr.mxu0 0.0
    %1181 = vmatpush1.xpose.msra.mxu0 0.0
    %1182 = vmatprep.subr.mxu0 0.0
    %1183 = vmatpush1.xpose.msra.mxu0 0.0
    %1184 = vmatprep.subr.mxu0 0.0
    %1185 = vmatpush1.xpose.msra.mxu0 0.0
    %1186 = vmatprep.subr.mxu0 0.0
    %1187 = vmatpush1.xpose.msra.mxu0 0.0
    %1188 = vmatprep.subr.mxu0 0.0
    %1189 = vmatpush1.xpose.msra.mxu0 0.0
    %1190 = vmatprep.subr.mxu0 0.0
    %1191 = vmatpush1.xpose.msra.mxu0 0.0
    %1192 = vmatprep.subr.mxu0 0.0
    %1193 = vmatpush1.xpose.msra.mxu0 0.0
    %1194 = vmatprep.subr.mxu0 0.0
    %1195 = vmatpush1.xpose.msra.mxu0 0.0
    %1196 = vmatprep.subr.mxu0 0.0
    %1197 = vmatpush1.xpose.msra.mxu0 0.0
    %1198 = vmatprep.mubr.f32.mxu0 0.0
    %1199 = vmatmul.mubr.f32.gmra.mrb[0].mxu0 %v1124
    %v1200 = vpop.f32.mrb[0].mxu0
    %v1201 = vadd.f32 0.0, %v1200
    %v1202 = vpop.f32.mrb[0].mxu0
    %1203 = vmatprep.mubr.f32.mxu0 0.0
    %1204 = vmatmul.mubr.f32.gmra.mrb[0].mxu0 %v1127
    %v1205 = vpop.f32.mrb[0].mxu0
    %v1206 = vadd.f32 0.0, %v1205
    %v1207 = vpop.f32.mrb[0].mxu0
    %1208 = vmatprep.mubr.f32.mxu0 0.0
    %1209 = vmatmul.mubr.f32.gmra.mrb[0].mxu0 %v1130
    %v1210 = vpop.f32.mrb[0].mxu0
    %v1211 = vadd.f32 0.0, %v1210
    %v1212 = vpop.f32.mrb[0].mxu0
    %1213 = vdwg.mxu0
    %v1214 = vsel %vm220, %v1201, -inf
    %v1215 = vsel %vm221, %v1206, -inf
    %v1216 = vsel %vm222, %v1211, -inf
    %v1217 = vsel %vm161, %v1214, -inf
    %1218 = vmax.xlane.f32.xlu0 %v1217
    %v1219 = vpop.xlane.xlu0 %1218
    %v1220 = vsel %vm161, %v1215, -inf
    %1221 = vmax.xlane.f32.xlu0 %v1220
    %v1222 = vpop.xlane.xlu0 %1221
    %v1223 = vsel %vm161, %v1216, -inf
    %1224 = vmax.xlane.f32.xlu0 %v1223
    %v1225 = vpop.xlane.xlu0 %1224
    %v1226 = vsub.f32 %v1214, %v1219
    %v1227 = vsub.f32 %v1215, %v1222
    %v1228 = vsub.f32 %v1216, %v1225
    %v1229 = vmul.f32 %v1226, 1.442695
    %v1230 = vpow.pop %v1229
    %v1231 = vmul.f32 %v1227, 1.442695
    %v1232 = vpow.pop %v1231
    %v1233 = vmul.f32 %v1228, 1.442695
    %v1234 = vpow.pop %v1233
    %v1235 = vsel %vm161, %v1230, 0.0
    %1236 = vadd.xlane.f32.xlu0 %v1235
    %v1237 = vpop.xlane.xlu0 %1236
    %v1238 = vsel %vm161, %v1232, 0.0
    %1239 = vadd.xlane.f32.xlu0 %v1238
    %v1240 = vpop.xlane.xlu0 %1239
    %v1241 = vsel %vm161, %v1234, 0.0
    %1242 = vadd.xlane.f32.xlu0 %v1241
    %v1243 = vpop.xlane.xlu0 %1242
    %v1244 = vrcp.pop %v1237
    %v1245 = vrcp.pop %v1240
    %v1246 = vrcp.pop %v1243
    %v1247 = vmul.f32 %v1230, %v1244
    %v1248 = vmul.f32 %v1232, %v1245
    %v1249 = vmul.f32 %v1234, %v1246
    %1251 = vrot.lane.b32.xlu0 %v145, 112
    %v1252 = vpop.permute.xlu0 %1251
    %v1255 = vsel %vm161, %v1247, 0
    %v1258 = vsel %vm161, %v1248, 0
    %v1261 = vsel %vm161, %v1249, 0
    %1263 = vmatprep.subr.mxu0 0.0
    %1264 = vmatpush1.msra.mxu0 %v1252
    %1265 = vmatprep.subr.mxu0 0.0
    %1266 = vmatpush1.msra.mxu0 0.0
    %1267 = vmatprep.subr.mxu0 0.0
    %1268 = vmatpush1.msra.mxu0 0.0
    %1269 = vmatprep.subr.mxu0 0.0
    %1270 = vmatpush1.msra.mxu0 0.0
    %1271 = vmatprep.subr.mxu0 0.0
    %1272 = vmatpush1.msra.mxu0 0.0
    %1273 = vmatprep.subr.mxu0 0.0
    %1274 = vmatpush1.msra.mxu0 0.0
    %1275 = vmatprep.subr.mxu0 0.0
    %1276 = vmatpush1.msra.mxu0 0.0
    %1277 = vmatprep.subr.mxu0 0.0
    %1278 = vmatpush1.msra.mxu0 0.0
    %1279 = vmatprep.subr.mxu0 0.0
    %1280 = vmatpush1.msra.mxu0 0.0
    %1281 = vmatprep.subr.mxu0 0.0
    %1282 = vmatpush1.msra.mxu0 0.0
    %1283 = vmatprep.subr.mxu0 0.0
    %1284 = vmatpush1.msra.mxu0 0.0
    %1285 = vmatprep.subr.mxu0 0.0
    %1286 = vmatpush1.msra.mxu0 0.0
    %1287 = vmatprep.subr.mxu0 0.0
    %1288 = vmatpush1.msra.mxu0 0.0
    %1289 = vmatprep.subr.mxu0 0.0
    %1290 = vmatpush1.msra.mxu0 0.0
    %1291 = vmatprep.subr.mxu0 0.0
    %1292 = vmatpush1.msra.mxu0 0.0
    %1293 = vmatprep.subr.mxu0 0.0
    %1294 = vmatpush1.msra.mxu0 0.0
    %1295 = vmatprep.subr.mxu0 0.0
    %1296 = vmatpush1.msra.mxu0 0.0
    %1297 = vmatprep.subr.mxu0 0.0
    %1298 = vmatpush1.msra.mxu0 0.0
    %1299 = vmatprep.subr.mxu0 0.0
    %1300 = vmatpush1.msra.mxu0 0.0
    %1301 = vmatprep.subr.mxu0 0.0
    %1302 = vmatpush1.msra.mxu0 0.0
    %1303 = vmatprep.subr.mxu0 0.0
    %1304 = vmatpush1.msra.mxu0 0.0
    %1305 = vmatprep.subr.mxu0 0.0
    %1306 = vmatpush1.msra.mxu0 0.0
    %1307 = vmatprep.subr.mxu0 0.0
    %1308 = vmatpush1.msra.mxu0 0.0
    %1309 = vmatprep.subr.mxu0 0.0
    %1310 = vmatpush1.msra.mxu0 0.0
    %1311 = vmatprep.subr.mxu0 0.0
    %1312 = vmatpush1.msra.mxu0 0.0
    %1313 = vmatprep.subr.mxu0 0.0
    %1314 = vmatpush1.msra.mxu0 0.0
    %1315 = vmatprep.subr.mxu0 0.0
    %1316 = vmatpush1.msra.mxu0 0.0
    %1317 = vmatprep.subr.mxu0 0.0
    %1318 = vmatpush1.msra.mxu0 0.0
    %1319 = vmatprep.subr.mxu0 0.0
    %1320 = vmatpush1.msra.mxu0 0.0
    %1321 = vmatprep.subr.mxu0 0.0
    %1322 = vmatpush1.msra.mxu0 0.0
    %1323 = vmatprep.subr.mxu0 0.0
    %1324 = vmatpush1.msra.mxu0 0.0
    %1325 = vmatprep.subr.mxu0 0.0
    %1326 = vmatpush1.msra.mxu0 0.0
    %1327 = vmatprep.mubr.f32.mxu0 0.0
    %1328 = vmatmul.mubr.f32.gmra.mrb[0].mxu0 %v1255
    %v1329 = vpop.f32.mrb[0].mxu0
    %v1330 = vadd.f32 0.0, %v1329
    %v1331 = vpop.f32.mrb[0].mxu0
    %1332 = vmatprep.mubr.f32.mxu0 0.0
    %1333 = vmatmul.mubr.f32.gmra.mrb[0].mxu0 %v1258
    %v1334 = vpop.f32.mrb[0].mxu0
    %v1335 = vadd.f32 0.0, %v1334
    %v1336 = vpop.f32.mrb[0].mxu0
    %1337 = vmatprep.mubr.f32.mxu0 0.0
    %1338 = vmatmul.mubr.f32.gmra.mrb[0].mxu0 %v1261
    %v1339 = vpop.f32.mrb[0].mxu0
    %v1340 = vadd.f32 0.0, %v1339
    %v1341 = vpop.f32.mrb[0].mxu0
    %1342 = vdwg.mxu0
    %1343 = vst.msk [vmem:[#allocation3] sm:$0xff] %vm223, %v1330
    %1345 = vrot.lane.b32.xlu0 %v1335, 16
    %v1346 = vpop.permute.xlu0 %1345
    %1348 = vst.msk [vmem:[#allocation3] sm:$0xff] %vm460, %v1346
    %1350 = vrot.lane.b32.xlu0 %v1340, 32
    %v1351 = vpop.permute.xlu0 %1350
    %1353 = vst.msk [vmem:[#allocation3] sm:$0xff] %vm466, %v1351
    %v1354 = vld [vmem:[#allocation3] sm:$0xff]
    %v1355 = vpack.c.bf16 %v1354, %v1354
    %v1356 = vld [vmem:[%s5 + $0x18] sm:$0xf]
    %v1357 = vld [vmem:[%s5 + $0x1c] sm:$0xf]
    %v1358 = vld [vmem:[%s5 + $0x20] sm:$0xf]
    %v1359 = vld [vmem:[%s5 + $0x24] sm:$0xf]
    %v1360 = vld [vmem:[%s5 + $0x28] sm:$0xf]
    %v1361 = vld [vmem:[%s5 + $0x2c] sm:$0xf]
    %v1368 = vunpack.c.l.b16 %v1356
    %v1369 = vunpack.c.l.b16 %v1357
    %v1370 = vunpack.c.l.b16 %v1358
    %v1371 = vunpack.c.l.b16 %v1359
    %v1372 = vunpack.c.l.b16 %v1360
    %v1373 = vunpack.c.l.b16 %v1361
    %v1374 = vpack.c.b16 %v1369, %v1368
    %v1375 = vpack.c.b16 %v1371, %v1370
    %v1376 = vpack.c.b16 %v1373, %v1372
    %v1381 = vsel %vm750, %v1355, 0
    %1383 = vmatprep.subr.bf16.mxu0 0
    %1384 = vmatpush1.bf16.msra.mxu0 %v1374
    %1385 = vmatprep.subr.bf16.mxu0 0
    %1386 = vmatpush1.bf16.msra.mxu0 %v1375
    %1387 = vmatprep.subr.bf16.mxu0 0
    %1388 = vmatpush1.bf16.msra.mxu0 %v1376
    %1389 = vmatprep.subr.bf16.mxu0 0
    %1390 = vmatpush1.bf16.msra.mxu0 0
    %1391 = vmatprep.subr.bf16.mxu0 0
    %1392 = vmatpush1.bf16.msra.mxu0 0
    %1393 = vmatprep.subr.bf16.mxu0 0
    %1394 = vmatpush1.bf16.msra.mxu0 0
    %1395 = vmatprep.subr.bf16.mxu0 0
    %1396 = vmatpush1.bf16.msra.mxu0 0
    %1397 = vmatprep.subr.bf16.mxu0 0
    %1398 = vmatpush1.bf16.msra.mxu0 0
    %1399 = vmatprep.subr.bf16.mxu0 0
    %1400 = vmatpush1.bf16.msra.mxu0 0
    %1401 = vmatprep.subr.bf16.mxu0 0
    %1402 = vmatpush1.bf16.msra.mxu0 0
    %1403 = vmatprep.subr.bf16.mxu0 0
    %1404 = vmatpush1.bf16.msra.mxu0 0
    %1405 = vmatprep.subr.bf16.mxu0 0
    %1406 = vmatpush1.bf16.msra.mxu0 0
    %1407 = vmatprep.subr.bf16.mxu0 0
    %1408 = vmatpush1.bf16.msra.mxu0 0
    %1409 = vmatprep.subr.bf16.mxu0 0
    %1410 = vmatpush1.bf16.msra.mxu0 0
    %1411 = vmatprep.subr.bf16.mxu0 0
    %1412 = vmatpush1.bf16.msra.mxu0 0
    %1413 = vmatprep.subr.bf16.mxu0 0
    %1414 = vmatpush1.bf16.msra.mxu0 0
    %1415 = vmatprep.mubr.bf16.mxu0 0
    %1416 = vmatmul.mubr.bf16.gmra.mrb[0].mxu0 %v1381
    %v1417 = vpop.f32.mrb[0].mxu0
    %v1418 = vadd.f32 0.0, %v1417
    %v1419 = vpop.f32.mrb[0].mxu0
    %v1420 = vpop.f32.mrb[0].mxu0
    %v1421 = vpop.f32.mrb[0].mxu0
    %1422 = vdwg.mxu0
    %v1429 = vunpack.c.l.b16 %v1100
    %v1430 = vunpack.c.l.b16 %v1101
    %v1431 = vunpack.c.l.b16 %v1102
    %v1432 = vunpack.c.l.b16 %v1103
    %v1433 = vunpack.c.l.b16 %v1104
    %v1434 = vunpack.c.l.b16 %v1105
    %v1435 = vpack.c.b16 %v1430, %v1429
    %v1436 = vpack.c.b16 %v1432, %v1431
    %v1437 = vpack.c.b16 %v1434, %v1433
    %v1442 = vsel %vm750, %v1099, 0
    %1444 = vmatprep.subr.bf16.mxu0 0
    %1445 = vmatpush1.bf16.msra.mxu0 %v1435
    %1446 = vmatprep.subr.bf16.mxu0 0
    %1447 = vmatpush1.bf16.msra.mxu0 %v1436
    %1448 = vmatprep.subr.bf16.mxu0 0
    %1449 = vmatpush1.bf16.msra.mxu0 %v1437
    %1450 = vmatprep.subr.bf16.mxu0 0
    %1451 = vmatpush1.bf16.msra.mxu0 0
    %1452 = vmatprep.subr.bf16.mxu0 0
    %1453 = vmatpush1.bf16.msra.mxu0 0
    %1454 = vmatprep.subr.bf16.mxu0 0
    %1455 = vmatpush1.bf16.msra.mxu0 0
    %1456 = vmatprep.subr.bf16.mxu0 0
    %1457 = vmatpush1.bf16.msra.mxu0 0
    %1458 = vmatprep.subr.bf16.mxu0 0
    %1459 = vmatpush1.bf16.msra.mxu0 0
    %1460 = vmatprep.subr.bf16.mxu0 0
    %1461 = vmatpush1.bf16.msra.mxu0 0
    %1462 = vmatprep.subr.bf16.mxu0 0
    %1463 = vmatpush1.bf16.msra.mxu0 0
    %1464 = vmatprep.subr.bf16.mxu0 0
    %1465 = vmatpush1.bf16.msra.mxu0 0
    %1466 = vmatprep.subr.bf16.mxu0 0
    %1467 = vmatpush1.bf16.msra.mxu0 0
    %1468 = vmatprep.subr.bf16.mxu0 0
    %1469 = vmatpush1.bf16.msra.mxu0 0
    %1470 = vmatprep.subr.bf16.mxu0 0
    %1471 = vmatpush1.bf16.msra.mxu0 0
    %1472 = vmatprep.subr.bf16.mxu0 0
    %1473 = vmatpush1.bf16.msra.mxu0 0
    %1474 = vmatprep.subr.bf16.mxu0 0
    %1475 = vmatpush1.bf16.msra.mxu0 0
    %1476 = vmatprep.mubr.bf16.mxu0 0
    %1477 = vmatmul.mubr.bf16.gmra.mrb[0].mxu0 %v1442
    %v1478 = vpop.f32.mrb[0].mxu0
    %v1479 = vadd.f32 %v1418, %v1478
    %v1480 = vpop.f32.mrb[0].mxu0
    %v1481 = vpop.f32.mrb[0].mxu0
    %v1482 = vpop.f32.mrb[0].mxu0
    %1483 = vdwg.mxu0
    %1484 = vst.msk [vmem:[#allocation4 + $0x8] sm:$0xff] %vm100, %v1479
    // Predicated region
    $region26: #{fn.1} parent=1 // pred_check
      _
    $region27: #{fn.1} parent=1 // pred_check_branch
      %1486 = sbr.rel (0) target = $region29
    $region28: #{fn.1} parent=1 // pred_region
      %s1488 = ssub.s32 256, 256
      %1489 = vsyncadd [#allocation5], %s1488
      %s1490 = sshll.u32 [#allocation4], 4
      %s1491 = int_to_ptr.vmem [resolvable:$true] %s1490
      %1496 = dma.vmem_to_hbm [thread:$0]  %s1491, 256, %s6, [#allocation5], 128, 128, 8
    $region29: #{fn.1} parent=1 // pred_fallthru
      _
    // Predicated region
    $region30: #{fn.1} parent=1 // pred_check
      _
    $region31: #{fn.1} parent=1 // pred_check_branch
      %1498 = sbr.rel (0) target = $region33
    $region32: #{fn.1} parent=1 // pred_region
      %1499 = dma.done [#allocation5], 256
    $region33: #{fn.1} parent=1 // pred_fallthru
      _
    %1500 = vsyncpa [#allocation5], 1

</llo_original>
